<compile_context>
chip_gen: v5e
topology: v5e:2x2
jax: 0.10.0
libtpu: 0.0.40
codegen_flags: <defaults>
</compile_context>

<pallas_src>
import functools

import jax
import jax.numpy as jnp
from jax.experimental import pallas as pl
from jax.experimental.pallas import tpu as pltpu

FEAT_DIM = 1536      # EfficientNet-b3 feature dimension (matches fc_pre in_features)
FC_SIZE = 128
HIDDEN_SIZE = 64
NUM_CLASSES = 10
NUM_LAYERS = 2

# Only use the jnp.repeat-expanded (CHW, FC) feature weight while it stays small
# relative to VMEM (v7x has only 64 MiB); otherwise pre-pool HxW in the wrapper.
_FOLDED_WEIGHT_LIMIT_BYTES = 8 * 1024 * 1024


def _num_tensorcores():
    """TensorCores per chip: 2 on v7x, 1 on v5e/v6e.  Fallback 1 is always correct."""
    try:
        info = pltpu.get_tpu_info()
        for attr in ("num_tensorcores", "tensorcore_count", "num_cores", "core_count"):
            v = getattr(info, attr, None)
            if isinstance(v, int) and 1 <= v <= 8:
                return v
    except Exception:
        pass
    return 1


# ---------------------------------------------------------------------------
# Fused kernel: feature/fc_pre matmul -> interleaved 2-layer LSTM -> head -> softmax
# ---------------------------------------------------------------------------
def _fused_kernel(T, bb,
                  x_ref, wfeat_ref, bfeat_ref,
                  wih0_ref, whh0_ref, b0_ref,
                  wih1_ref, whh1_ref, b1_ref,
                  wfc_ref, bfc_ref, o_ref):
    H = whh0_ref.shape[0]          # hidden size
    f32 = jnp.float32

    # ---- backbone stub + fc_pre: one lane-dense bf16 MXU matmul over every frame ----
    x2 = x_ref[0]                                                    # (T*bb, K), time-major rows
    feat = (jnp.dot(x2, wfeat_ref[...], preferred_element_type=f32)
            + bfeat_ref[...])                                        # (T*bb, FC) f32

    # ---- LSTM layer 0: x @ W_ih hoisted out of the recurrence (one big matmul) ----
    gx0 = (jnp.dot(feat.astype(jnp.bfloat16), wih0_ref[...],
                   preferred_element_type=f32) + b0_ref[...])        # (T*bb, 4H), rows = (t, b)

    # Hoist weight / bias loads out of the unrolled loop (bf16 weights, f32 bias).
    whh0 = whh0_ref[...]
    wih1 = wih1_ref[...]
    whh1 = whh1_ref[...]
    b1 = b1_ref[...]

    def cell(gates, c):
        # Gate columns pre-permuted at trace time to [i, f, o, g]:
        # one contiguous sigmoid over 3H lanes + one tanh over H lanes.
        sig = jax.nn.sigmoid(gates[:, :3 * H])
        g_g = jnp.tanh(gates[:, 3 * H:])
        i_g, f_g, o_g = sig[:, :H], sig[:, H:2 * H], sig[:, 2 * H:]
        c_new = f_g * c + i_g * g_g
        h_new = o_g * jnp.tanh(c_new)
        return h_new, c_new

    h0 = jnp.zeros((bb, H), f32)
    c0 = jnp.zeros((bb, H), f32)
    h1 = jnp.zeros((bb, H), f32)
    c1 = jnp.zeros((bb, H), f32)
    hsum = jnp.zeros((bb, H), f32)

    # 1-step-skewed interleave of the two LSTM layers: iteration t issues layer-0 step t
    # and layer-1 step t-1.  Both matmul groups read only the *previous* h0/h1, so they
    # are independent within the iteration and can overlap in the MXU pipeline.
    for t in range(T + 1):                       # static unroll (short T)
        h0b = h0.astype(jnp.bfloat16)
        h1b = h1.astype(jnp.bfloat16)
        if t < T:                                # layer 0, step t
            g0 = (gx0[t * bb:(t + 1) * bb, :]
                  + jnp.dot(h0b, whh0, preferred_element_type=f32))
        if t > 0:                                # layer 1, step t-1 (input = h0[t-1])
            g1 = (jnp.dot(h0b, wih1, preferred_element_type=f32)
                  + jnp.dot(h1b, whh1, preferred_element_type=f32)
                  + b1)
        if t < T:
            h0, c0 = cell(g0, c0)
        if t > 0:
            h1, c1 = cell(g1, c1)
            hsum = hsum + h1                     # running sum for the temporal mean

    # ---- head: temporal mean (1/T folded into wfc at trace time) -> fc -> softmax ----
    logits = (jnp.dot(hsum, wfc_ref[...], preferred_element_type=f32)
              + bfc_ref[...])                                        # (bb, NC)
    m = jnp.max(logits, axis=-1, keepdims=True)
    e = jnp.exp(logits - m)
    inv = pl.reciprocal(jnp.sum(e, axis=-1, keepdims=True), approx=True)
    o_ref[0] = e * inv


# ---------------------------------------------------------------------------
# Parameter construction (deterministic, synthetic)
# ---------------------------------------------------------------------------
def init_params(key, channels):
    ks = jax.random.split(key, 16)
    p = {}
    p["w_feat"] = 0.1 * jax.random.normal(ks[0], (channels, FEAT_DIM), jnp.float32)
    p["b_feat"] = 0.1 * jax.random.normal(ks[1], (1, FEAT_DIM), jnp.float32)
    p["w_pre"] = 0.05 * jax.random.normal(ks[2], (FEAT_DIM, FC_SIZE), jnp.float32)
    p["b_pre"] = 0.05 * jax.random.normal(ks[3], (1, FC_SIZE), jnp.float32)
    in_dims = [FC_SIZE, HIDDEN_SIZE]
    for layer in range(NUM_LAYERS):
        kk = jax.random.split(ks[4 + layer], 3)
        # PyTorch gate order (i, f, g, o) along the 4H axis; weight_ih/weight_hh would need
        # a transpose from (4H, in) and b = b_ih + b_hh folding when loading real weights.
        p[f"w_ih_{layer}"] = 0.1 * jax.random.normal(
            kk[0], (in_dims[layer], 4 * HIDDEN_SIZE), jnp.float32)
        p[f"w_hh_{layer}"] = 0.1 * jax.random.normal(
            kk[1], (HIDDEN_SIZE, 4 * HIDDEN_SIZE), jnp.float32)
        p[f"b_{layer}"] = 0.1 * jax.random.normal(
            kk[2], (1, 4 * HIDDEN_SIZE), jnp.float32)
    p["w_fc"] = 0.1 * jax.random.normal(ks[8], (HIDDEN_SIZE, NUM_CLASSES), jnp.float32)
    p["b_fc"] = 0.1 * jax.random.normal(ks[9], (1, NUM_CLASSES), jnp.float32)
    return p


def _permute_gates_ifog(w):
    """Reorder the 4H gate axis from PyTorch (i,f,g,o) to (i,f,o,g)."""
    H = w.shape[-1] // 4
    return jnp.concatenate([w[..., :2 * H], w[..., 3 * H:], w[..., 2 * H:3 * H]], axis=-1)


# ---------------------------------------------------------------------------
# Forward wrapper: trace-time weight folding + a single fused pallas_call
# ---------------------------------------------------------------------------
def efficientnet_lstm_forward(x, params):
    B, T, C, H, W = x.shape
    CHW = C * H * W
    NC = params["w_fc"].shape[1]

    # Fold [global avg-pool over HxW] -> Linear(C, 1536) [backbone stub]
    #   -> Linear(1536, fc_size) [fc_pre] into one weight.  Exact.
    w_comb = params["w_feat"] @ params["w_pre"]                      # (C, FC)
    b_comb = params["b_feat"] @ params["w_pre"] + params["b_pre"]    # (1, FC)

    if CHW * FC_SIZE * 2 <= _FOLDED_WEIGHT_LIMIT_BYTES:
        # Fast path: expanded (CHW, FC) bf16 weight -> one lane-dense matmul over raw frames.
        w_feat_k = jnp.repeat(w_comb / (H * W), H * W, axis=0).astype(jnp.bfloat16)
        x_rows = x.reshape(B, T, CHW)
    else:
        # Large-resolution path: pre-pool HxW (part of the stubbed backbone) so the
        # per-kernel weight stays (C, FC) and never threatens v7x's 64 MiB VMEM.
        w_feat_k = w_comb.astype(jnp.bfloat16)
        x_rows = x.reshape(B, T, C, H * W).mean(axis=-1)

    # Gate-permuted (i,f,o,g), bf16 LSTM weights; f32 biases; 1/T folded into head weight.
    wih0 = _permute_gates_ifog(params["w_ih_0"]).astype(jnp.bfloat16)
    whh0 = _permute_gates_ifog(params["w_hh_0"]).astype(jnp.bfloat16)
    b0 = _permute_gates_ifog(params["b_0"])
    wih1 = _permute_gates_ifog(params["w_ih_1"]).astype(jnp.bfloat16)
    whh1 = _permute_gates_ifog(params["w_hh_1"]).astype(jnp.bfloat16)
    b1 = _permute_gates_ifog(params["b_1"])
    wfc = params["w_fc"] * (1.0 / T)
    bfc = params["b_fc"]

    # Batch blocking: exactly one block per TensorCore (1 on v5e/v6e, 2 on v7x).
    cores = _num_tensorcores()
    nb = cores if (cores > 1 and B % cores == 0) else 1
    bb = B // nb

    # Time-major rows inside each batch block: (nb, T*bb, K) bf16 slab.
    K = x_rows.shape[-1]
    x_arr = (x_rows.reshape(nb, bb, T, K)
                   .transpose(0, 2, 1, 3)
                   .reshape(nb, T * bb, K)
                   .astype(jnp.bfloat16))

    def full_spec(a):
        nd = a.ndim
        return pl.BlockSpec(a.shape, lambda b, _nd=nd: (0,) * _nd)

    probs = pl.pallas_call(
        functools.partial(_fused_kernel, T, bb),
        out_shape=jax.ShapeDtypeStruct((nb, bb, NC), jnp.float32),
        grid=(nb,),
        in_specs=[
            pl.BlockSpec((1, T * bb, K), lambda b: (b, 0, 0)),       # frames (batch-blocked)
            full_spec(w_feat_k), full_spec(b_comb),
            full_spec(wih0), full_spec(whh0), full_spec(b0),
            full_spec(wih1), full_spec(whh1), full_spec(b1),
            full_spec(wfc), full_spec(bfc),
        ],
        out_specs=pl.BlockSpec((1, bb, NC), lambda b: (b, 0, 0)),
        compiler_params=pltpu.CompilerParams(dimension_semantics=("parallel",)),
    )(x_arr, w_feat_k, b_comb,
      wih0, whh0, b0,
      wih1, whh1, b1,
      wfc, bfc)

    return probs.reshape(B, NC)


if __name__ == "__main__":
    key = jax.random.PRNGKey(0)
    k_x, k_p = jax.random.split(key)

    B, T, C, H, W = 2, 8, 3, 16, 16
    x = jax.random.normal(k_x, (B, T, C, H, W), jnp.float32)
    params = init_params(k_p, C)

    out = jax.jit(efficientnet_lstm_forward)(x, params)
    out = jax.block_until_ready(out)

    assert out.shape == (B, NUM_CLASSES)
    # rows of the softmax output must sum to 1 (approx reciprocal => loose tolerance)
    assert bool(jnp.all(jnp.abs(jnp.sum(out, axis=-1) - 1.0) < 5e-3))
    print("KERNEL_OK")
</pallas_src>

<mosaic_0001>
module attributes {stable_mosaic.version = 11 : i64} {
  func.func @_fused_kernel(%arg0: i32, %arg1: memref<1x16x768xbf16, #tpu.memory_space<vmem>>, %arg2: memref<768x128xbf16, #tpu.memory_space<vmem>>, %arg3: memref<1x128xf32, #tpu.memory_space<vmem>>, %arg4: memref<128x256xbf16, #tpu.memory_space<vmem>>, %arg5: memref<64x256xbf16, #tpu.memory_space<vmem>>, %arg6: memref<1x256xf32, #tpu.memory_space<vmem>>, %arg7: memref<64x256xbf16, #tpu.memory_space<vmem>>, %arg8: memref<64x256xbf16, #tpu.memory_space<vmem>>, %arg9: memref<1x256xf32, #tpu.memory_space<vmem>>, %arg10: memref<64x10xf32, #tpu.memory_space<vmem>>, %arg11: memref<1x10xf32, #tpu.memory_space<vmem>>, %arg12: memref<1x2x10xf32, #tpu.memory_space<vmem>>) attributes {dimension_semantics = [#tpu.dimension_semantics<parallel>], iteration_bounds = array<i64: 1>, scalar_prefetch = 0 : i64, scratch_operands = 0 : i64, tpu.core_type = #tpu.core_type<tc>, window_params = [{transform_indices = @transform_0, window_bounds = array<i64: 1, 16, 768>}, {pipeline_mode = #tpu.pipeline_mode<synchronous>, transform_indices = @transform_1, window_bounds = array<i64: 768, 128>}, {pipeline_mode = #tpu.pipeline_mode<synchronous>, transform_indices = @transform_2, window_bounds = array<i64: 1, 128>}, {pipeline_mode = #tpu.pipeline_mode<synchronous>, transform_indices = @transform_3, window_bounds = array<i64: 128, 256>}, {pipeline_mode = #tpu.pipeline_mode<synchronous>, transform_indices = @transform_4, window_bounds = array<i64: 64, 256>}, {pipeline_mode = #tpu.pipeline_mode<synchronous>, transform_indices = @transform_5, window_bounds = array<i64: 1, 256>}, {pipeline_mode = #tpu.pipeline_mode<synchronous>, transform_indices = @transform_6, window_bounds = array<i64: 64, 256>}, {pipeline_mode = #tpu.pipeline_mode<synchronous>, transform_indices = @transform_7, window_bounds = array<i64: 64, 256>}, {pipeline_mode = #tpu.pipeline_mode<synchronous>, transform_indices = @transform_8, window_bounds = array<i64: 1, 256>}, {pipeline_mode = #tpu.pipeline_mode<synchronous>, transform_indices = @transform_9, window_bounds = array<i64: 64, 10>}, {pipeline_mode = #tpu.pipeline_mode<synchronous>, transform_indices = @transform_10, window_bounds = array<i64: 1, 10>}, {transform_indices = @transform_11, window_bounds = array<i64: 1, 2, 10>}]} {
    %c0 = arith.constant 0 : index
    %c0_0 = arith.constant 0 : index
    %c0_1 = arith.constant 0 : index
    %0 = vector.load %arg1[%c0, %c0_0, %c0_1] : memref<1x16x768xbf16, #tpu.memory_space<vmem>>, vector<1x16x768xbf16>
    %1 = vector.shape_cast %0 : vector<1x16x768xbf16> to vector<16x768xbf16>
    %c0_2 = arith.constant 0 : index
    %c0_3 = arith.constant 0 : index
    %2 = vector.load %arg2[%c0_2, %c0_3] : memref<768x128xbf16, #tpu.memory_space<vmem>>, vector<768x128xbf16>
    %cst = arith.constant dense<0.000000e+00> : vector<16x128xf32>
    %3 = tpu.matmul %1, %2, %cst {dimension_numbers = #tpu.dot_dimension_numbers<[1], [0], [0], [1], [0, 0, 1, 1], [], []>} : vector<16x768xbf16>, vector<768x128xbf16>, vector<16x128xf32> -> vector<16x128xf32>
    %c0_4 = arith.constant 0 : index
    %c0_5 = arith.constant 0 : index
    %4 = vector.load %arg3[%c0_4, %c0_5] : memref<1x128xf32, #tpu.memory_space<vmem>>, vector<1x128xf32>
    %5 = vector.broadcast %4 : vector<1x128xf32> to vector<16x128xf32>
    %6 = arith.addf %3, %5 : vector<16x128xf32>
    %7 = arith.truncf %6 : vector<16x128xf32> to vector<16x128xbf16>
    %c0_6 = arith.constant 0 : index
    %c0_7 = arith.constant 0 : index
    %8 = vector.load %arg4[%c0_6, %c0_7] : memref<128x256xbf16, #tpu.memory_space<vmem>>, vector<128x256xbf16>
    %cst_8 = arith.constant dense<0.000000e+00> : vector<16x256xf32>
    %9 = tpu.matmul %7, %8, %cst_8 {dimension_numbers = #tpu.dot_dimension_numbers<[1], [0], [0], [1], [0, 0, 1, 1], [], []>} : vector<16x128xbf16>, vector<128x256xbf16>, vector<16x256xf32> -> vector<16x256xf32>
    %c0_9 = arith.constant 0 : index
    %c0_10 = arith.constant 0 : index
    %10 = vector.load %arg6[%c0_9, %c0_10] : memref<1x256xf32, #tpu.memory_space<vmem>>, vector<1x256xf32>
    %11 = vector.broadcast %10 : vector<1x256xf32> to vector<16x256xf32>
    %12 = arith.addf %9, %11 : vector<16x256xf32>
    %c0_11 = arith.constant 0 : index
    %c0_12 = arith.constant 0 : index
    %13 = vector.load %arg5[%c0_11, %c0_12] : memref<64x256xbf16, #tpu.memory_space<vmem>>, vector<64x256xbf16>
    %c0_13 = arith.constant 0 : index
    %c0_14 = arith.constant 0 : index
    %14 = vector.load %arg7[%c0_13, %c0_14] : memref<64x256xbf16, #tpu.memory_space<vmem>>, vector<64x256xbf16>
    %c0_15 = arith.constant 0 : index
    %c0_16 = arith.constant 0 : index
    %15 = vector.load %arg8[%c0_15, %c0_16] : memref<64x256xbf16, #tpu.memory_space<vmem>>, vector<64x256xbf16>
    %c0_17 = arith.constant 0 : index
    %c0_18 = arith.constant 0 : index
    %16 = vector.load %arg9[%c0_17, %c0_18] : memref<1x256xf32, #tpu.memory_space<vmem>>, vector<1x256xf32>
    %cst_19 = arith.constant 0.000000e+00 : f32
    %17 = vector.broadcast %cst_19 : f32 to vector<2x64xf32>
    %cst_20 = arith.constant 0.000000e+00 : f32
    %18 = vector.broadcast %cst_20 : f32 to vector<2x64xf32>
    %cst_21 = arith.constant 0.000000e+00 : f32
    %19 = vector.broadcast %cst_21 : f32 to vector<2x64xf32>
    %cst_22 = arith.constant 0.000000e+00 : f32
    %20 = vector.broadcast %cst_22 : f32 to vector<2x64xf32>
    %cst_23 = arith.constant 0.000000e+00 : f32
    %21 = vector.broadcast %cst_23 : f32 to vector<2x64xf32>
    %22 = arith.truncf %17 : vector<2x64xf32> to vector<2x64xbf16>
    %23 = vector.extract_strided_slice %12 {offsets = [0, 0], sizes = [2, 256], strides = [1, 1]} : vector<16x256xf32> to vector<2x256xf32>
    %cst_24 = arith.constant dense<0.000000e+00> : vector<2x256xf32>
    %24 = tpu.matmul %22, %13, %cst_24 {dimension_numbers = #tpu.dot_dimension_numbers<[1], [0], [0], [1], [0, 0, 1, 1], [], []>} : vector<2x64xbf16>, vector<64x256xbf16>, vector<2x256xf32> -> vector<2x256xf32>
    %25 = arith.addf %23, %24 : vector<2x256xf32>
    %26 = vector.extract_strided_slice %25 {offsets = [0, 0], sizes = [2, 192], strides = [1, 1]} : vector<2x256xf32> to vector<2x192xf32>
    %27 = arith.negf %26 : vector<2x192xf32>
    %28 = math.exp %27 : vector<2x192xf32>
    %cst_25 = arith.constant 1.000000e+00 : f32
    %29 = vector.broadcast %cst_25 : f32 to vector<2x192xf32>
    %30 = arith.addf %29, %28 : vector<2x192xf32>
    %31 = arith.divf %29, %30 : vector<2x192xf32>
    %32 = vector.extract_strided_slice %25 {offsets = [0, 192], sizes = [2, 64], strides = [1, 1]} : vector<2x256xf32> to vector<2x64xf32>
    %33 = math.tanh %32 : vector<2x64xf32>
    %34 = vector.extract_strided_slice %31 {offsets = [0, 0], sizes = [2, 64], strides = [1, 1]} : vector<2x192xf32> to vector<2x64xf32>
    %35 = vector.extract_strided_slice %31 {offsets = [0, 64], sizes = [2, 64], strides = [1, 1]} : vector<2x192xf32> to vector<2x64xf32>
    %36 = vector.extract_strided_slice %31 {offsets = [0, 128], sizes = [2, 64], strides = [1, 1]} : vector<2x192xf32> to vector<2x64xf32>
    %37 = arith.mulf %35, %18 : vector<2x64xf32>
    %38 = arith.mulf %34, %33 : vector<2x64xf32>
    %39 = arith.addf %37, %38 : vector<2x64xf32>
    %40 = math.tanh %39 : vector<2x64xf32>
    %41 = arith.mulf %36, %40 : vector<2x64xf32>
    %42 = arith.truncf %41 : vector<2x64xf32> to vector<2x64xbf16>
    %43 = arith.truncf %19 : vector<2x64xf32> to vector<2x64xbf16>
    %44 = vector.extract_strided_slice %12 {offsets = [2, 0], sizes = [2, 256], strides = [1, 1]} : vector<16x256xf32> to vector<2x256xf32>
    %cst_26 = arith.constant dense<0.000000e+00> : vector<2x256xf32>
    %45 = tpu.matmul %42, %13, %cst_26 {dimension_numbers = #tpu.dot_dimension_numbers<[1], [0], [0], [1], [0, 0, 1, 1], [], []>} : vector<2x64xbf16>, vector<64x256xbf16>, vector<2x256xf32> -> vector<2x256xf32>
    %46 = arith.addf %44, %45 : vector<2x256xf32>
    %cst_27 = arith.constant dense<0.000000e+00> : vector<2x256xf32>
    %47 = tpu.matmul %42, %14, %cst_27 {dimension_numbers = #tpu.dot_dimension_numbers<[1], [0], [0], [1], [0, 0, 1, 1], [], []>} : vector<2x64xbf16>, vector<64x256xbf16>, vector<2x256xf32> -> vector<2x256xf32>
    %cst_28 = arith.constant dense<0.000000e+00> : vector<2x256xf32>
    %48 = tpu.matmul %43, %15, %cst_28 {dimension_numbers = #tpu.dot_dimension_numbers<[1], [0], [0], [1], [0, 0, 1, 1], [], []>} : vector<2x64xbf16>, vector<64x256xbf16>, vector<2x256xf32> -> vector<2x256xf32>
    %49 = arith.addf %47, %48 : vector<2x256xf32>
    %50 = vector.broadcast %16 : vector<1x256xf32> to vector<2x256xf32>
    %51 = arith.addf %49, %50 : vector<2x256xf32>
    %52 = vector.extract_strided_slice %46 {offsets = [0, 0], sizes = [2, 192], strides = [1, 1]} : vector<2x256xf32> to vector<2x192xf32>
    %53 = arith.negf %52 : vector<2x192xf32>
    %54 = math.exp %53 : vector<2x192xf32>
    %cst_29 = arith.constant 1.000000e+00 : f32
    %55 = vector.broadcast %cst_29 : f32 to vector<2x192xf32>
    %56 = arith.addf %55, %54 : vector<2x192xf32>
    %57 = arith.divf %55, %56 : vector<2x192xf32>
    %58 = vector.extract_strided_slice %46 {offsets = [0, 192], sizes = [2, 64], strides = [1, 1]} : vector<2x256xf32> to vector<2x64xf32>
    %59 = math.tanh %58 : vector<2x64xf32>
    %60 = vector.extract_strided_slice %57 {offsets = [0, 0], sizes = [2, 64], strides = [1, 1]} : vector<2x192xf32> to vector<2x64xf32>
    %61 = vector.extract_strided_slice %57 {offsets = [0, 64], sizes = [2, 64], strides = [1, 1]} : vector<2x192xf32> to vector<2x64xf32>
    %62 = vector.extract_strided_slice %57 {offsets = [0, 128], sizes = [2, 64], strides = [1, 1]} : vector<2x192xf32> to vector<2x64xf32>
    %63 = arith.mulf %61, %39 : vector<2x64xf32>
    %64 = arith.mulf %60, %59 : vector<2x64xf32>
    %65 = arith.addf %63, %64 : vector<2x64xf32>
    %66 = math.tanh %65 : vector<2x64xf32>
    %67 = arith.mulf %62, %66 : vector<2x64xf32>
    %68 = vector.extract_strided_slice %51 {offsets = [0, 0], sizes = [2, 192], strides = [1, 1]} : vector<2x256xf32> to vector<2x192xf32>
    %69 = arith.negf %68 : vector<2x192xf32>
    %70 = math.exp %69 : vector<2x192xf32>
    %cst_30 = arith.constant 1.000000e+00 : f32
    %71 = vector.broadcast %cst_30 : f32 to vector<2x192xf32>
    %72 = arith.addf %71, %70 : vector<2x192xf32>
    %73 = arith.divf %71, %72 : vector<2x192xf32>
    %74 = vector.extract_strided_slice %51 {offsets = [0, 192], sizes = [2, 64], strides = [1, 1]} : vector<2x256xf32> to vector<2x64xf32>
    %75 = math.tanh %74 : vector<2x64xf32>
    %76 = vector.extract_strided_slice %73 {offsets = [0, 0], sizes = [2, 64], strides = [1, 1]} : vector<2x192xf32> to vector<2x64xf32>
    %77 = vector.extract_strided_slice %73 {offsets = [0, 64], sizes = [2, 64], strides = [1, 1]} : vector<2x192xf32> to vector<2x64xf32>
    %78 = vector.extract_strided_slice %73 {offsets = [0, 128], sizes = [2, 64], strides = [1, 1]} : vector<2x192xf32> to vector<2x64xf32>
    %79 = arith.mulf %77, %20 : vector<2x64xf32>
    %80 = arith.mulf %76, %75 : vector<2x64xf32>
    %81 = arith.addf %79, %80 : vector<2x64xf32>
    %82 = math.tanh %81 : vector<2x64xf32>
    %83 = arith.mulf %78, %82 : vector<2x64xf32>
    %84 = arith.addf %21, %83 : vector<2x64xf32>
    %85 = arith.truncf %67 : vector<2x64xf32> to vector<2x64xbf16>
    %86 = arith.truncf %83 : vector<2x64xf32> to vector<2x64xbf16>
    %87 = vector.extract_strided_slice %12 {offsets = [4, 0], sizes = [2, 256], strides = [1, 1]} : vector<16x256xf32> to vector<2x256xf32>
    %cst_31 = arith.constant dense<0.000000e+00> : vector<2x256xf32>
    %88 = tpu.matmul %85, %13, %cst_31 {dimension_numbers = #tpu.dot_dimension_numbers<[1], [0], [0], [1], [0, 0, 1, 1], [], []>} : vector<2x64xbf16>, vector<64x256xbf16>, vector<2x256xf32> -> vector<2x256xf32>
    %89 = arith.addf %87, %88 : vector<2x256xf32>
    %cst_32 = arith.constant dense<0.000000e+00> : vector<2x256xf32>
    %90 = tpu.matmul %85, %14, %cst_32 {dimension_numbers = #tpu.dot_dimension_numbers<[1], [0], [0], [1], [0, 0, 1, 1], [], []>} : vector<2x64xbf16>, vector<64x256xbf16>, vector<2x256xf32> -> vector<2x256xf32>
    %cst_33 = arith.constant dense<0.000000e+00> : vector<2x256xf32>
    %91 = tpu.matmul %86, %15, %cst_33 {dimension_numbers = #tpu.dot_dimension_numbers<[1], [0], [0], [1], [0, 0, 1, 1], [], []>} : vector<2x64xbf16>, vector<64x256xbf16>, vector<2x256xf32> -> vector<2x256xf32>
    %92 = arith.addf %90, %91 : vector<2x256xf32>
    %93 = vector.broadcast %16 : vector<1x256xf32> to vector<2x256xf32>
    %94 = arith.addf %92, %93 : vector<2x256xf32>
    %95 = vector.extract_strided_slice %89 {offsets = [0, 0], sizes = [2, 192], strides = [1, 1]} : vector<2x256xf32> to vector<2x192xf32>
    %96 = arith.negf %95 : vector<2x192xf32>
    %97 = math.exp %96 : vector<2x192xf32>
    %cst_34 = arith.constant 1.000000e+00 : f32
    %98 = vector.broadcast %cst_34 : f32 to vector<2x192xf32>
    %99 = arith.addf %98, %97 : vector<2x192xf32>
    %100 = arith.divf %98, %99 : vector<2x192xf32>
    %101 = vector.extract_strided_slice %89 {offsets = [0, 192], sizes = [2, 64], strides = [1, 1]} : vector<2x256xf32> to vector<2x64xf32>
    %102 = math.tanh %101 : vector<2x64xf32>
    %103 = vector.extract_strided_slice %100 {offsets = [0, 0], sizes = [2, 64], strides = [1, 1]} : vector<2x192xf32> to vector<2x64xf32>
    %104 = vector.extract_strided_slice %100 {offsets = [0, 64], sizes = [2, 64], strides = [1, 1]} : vector<2x192xf32> to vector<2x64xf32>
    %105 = vector.extract_strided_slice %100 {offsets = [0, 128], sizes = [2, 64], strides = [1, 1]} : vector<2x192xf32> to vector<2x64xf32>
    %106 = arith.mulf %104, %65 : vector<2x64xf32>
    %107 = arith.mulf %103, %102 : vector<2x64xf32>
    %108 = arith.addf %106, %107 : vector<2x64xf32>
    %109 = math.tanh %108 : vector<2x64xf32>
    %110 = arith.mulf %105, %109 : vector<2x64xf32>
    %111 = vector.extract_strided_slice %94 {offsets = [0, 0], sizes = [2, 192], strides = [1, 1]} : vector<2x256xf32> to vector<2x192xf32>
    %112 = arith.negf %111 : vector<2x192xf32>
    %113 = math.exp %112 : vector<2x192xf32>
    %cst_35 = arith.constant 1.000000e+00 : f32
    %114 = vector.broadcast %cst_35 : f32 to vector<2x192xf32>
    %115 = arith.addf %114, %113 : vector<2x192xf32>
    %116 = arith.divf %114, %115 : vector<2x192xf32>
    %117 = vector.extract_strided_slice %94 {offsets = [0, 192], sizes = [2, 64], strides = [1, 1]} : vector<2x256xf32> to vector<2x64xf32>
    %118 = math.tanh %117 : vector<2x64xf32>
    %119 = vector.extract_strided_slice %116 {offsets = [0, 0], sizes = [2, 64], strides = [1, 1]} : vector<2x192xf32> to vector<2x64xf32>
    %120 = vector.extract_strided_slice %116 {offsets = [0, 64], sizes = [2, 64], strides = [1, 1]} : vector<2x192xf32> to vector<2x64xf32>
    %121 = vector.extract_strided_slice %116 {offsets = [0, 128], sizes = [2, 64], strides = [1, 1]} : vector<2x192xf32> to vector<2x64xf32>
    %122 = arith.mulf %120, %81 : vector<2x64xf32>
    %123 = arith.mulf %119, %118 : vector<2x64xf32>
    %124 = arith.addf %122, %123 : vector<2x64xf32>
    %125 = math.tanh %124 : vector<2x64xf32>
    %126 = arith.mulf %121, %125 : vector<2x64xf32>
    %127 = arith.addf %84, %126 : vector<2x64xf32>
    %128 = arith.truncf %110 : vector<2x64xf32> to vector<2x64xbf16>
    %129 = arith.truncf %126 : vector<2x64xf32> to vector<2x64xbf16>
    %130 = vector.extract_strided_slice %12 {offsets = [6, 0], sizes = [2, 256], strides = [1, 1]} : vector<16x256xf32> to vector<2x256xf32>
    %cst_36 = arith.constant dense<0.000000e+00> : vector<2x256xf32>
    %131 = tpu.matmul %128, %13, %cst_36 {dimension_numbers = #tpu.dot_dimension_numbers<[1], [0], [0], [1], [0, 0, 1, 1], [], []>} : vector<2x64xbf16>, vector<64x256xbf16>, vector<2x256xf32> -> vector<2x256xf32>
    %132 = arith.addf %130, %131 : vector<2x256xf32>
    %cst_37 = arith.constant dense<0.000000e+00> : vector<2x256xf32>
    %133 = tpu.matmul %128, %14, %cst_37 {dimension_numbers = #tpu.dot_dimension_numbers<[1], [0], [0], [1], [0, 0, 1, 1], [], []>} : vector<2x64xbf16>, vector<64x256xbf16>, vector<2x256xf32> -> vector<2x256xf32>
    %cst_38 = arith.constant dense<0.000000e+00> : vector<2x256xf32>
    %134 = tpu.matmul %129, %15, %cst_38 {dimension_numbers = #tpu.dot_dimension_numbers<[1], [0], [0], [1], [0, 0, 1, 1], [], []>} : vector<2x64xbf16>, vector<64x256xbf16>, vector<2x256xf32> -> vector<2x256xf32>
    %135 = arith.addf %133, %134 : vector<2x256xf32>
    %136 = vector.broadcast %16 : vector<1x256xf32> to vector<2x256xf32>
    %137 = arith.addf %135, %136 : vector<2x256xf32>
    %138 = vector.extract_strided_slice %132 {offsets = [0, 0], sizes = [2, 192], strides = [1, 1]} : vector<2x256xf32> to vector<2x192xf32>
    %139 = arith.negf %138 : vector<2x192xf32>
    %140 = math.exp %139 : vector<2x192xf32>
    %cst_39 = arith.constant 1.000000e+00 : f32
    %141 = vector.broadcast %cst_39 : f32 to vector<2x192xf32>
    %142 = arith.addf %141, %140 : vector<2x192xf32>
    %143 = arith.divf %141, %142 : vector<2x192xf32>
    %144 = vector.extract_strided_slice %132 {offsets = [0, 192], sizes = [2, 64], strides = [1, 1]} : vector<2x256xf32> to vector<2x64xf32>
    %145 = math.tanh %144 : vector<2x64xf32>
    %146 = vector.extract_strided_slice %143 {offsets = [0, 0], sizes = [2, 64], strides = [1, 1]} : vector<2x192xf32> to vector<2x64xf32>
    %147 = vector.extract_strided_slice %143 {offsets = [0, 64], sizes = [2, 64], strides = [1, 1]} : vector<2x192xf32> to vector<2x64xf32>
    %148 = vector.extract_strided_slice %143 {offsets = [0, 128], sizes = [2, 64], strides = [1, 1]} : vector<2x192xf32> to vector<2x64xf32>
    %149 = arith.mulf %147, %108 : vector<2x64xf32>
    %150 = arith.mulf %146, %145 : vector<2x64xf32>
    %151 = arith.addf %149, %150 : vector<2x64xf32>
    %152 = math.tanh %151 : vector<2x64xf32>
    %153 = arith.mulf %148, %152 : vector<2x64xf32>
    %154 = vector.extract_strided_slice %137 {offsets = [0, 0], sizes = [2, 192], strides = [1, 1]} : vector<2x256xf32> to vector<2x192xf32>
    %155 = arith.negf %154 : vector<2x192xf32>
    %156 = math.exp %155 : vector<2x192xf32>
    %cst_40 = arith.constant 1.000000e+00 : f32
    %157 = vector.broadcast %cst_40 : f32 to vector<2x192xf32>
    %158 = arith.addf %157, %156 : vector<2x192xf32>
    %159 = arith.divf %157, %158 : vector<2x192xf32>
    %160 = vector.extract_strided_slice %137 {offsets = [0, 192], sizes = [2, 64], strides = [1, 1]} : vector<2x256xf32> to vector<2x64xf32>
    %161 = math.tanh %160 : vector<2x64xf32>
    %162 = vector.extract_strided_slice %159 {offsets = [0, 0], sizes = [2, 64], strides = [1, 1]} : vector<2x192xf32> to vector<2x64xf32>
    %163 = vector.extract_strided_slice %159 {offsets = [0, 64], sizes = [2, 64], strides = [1, 1]} : vector<2x192xf32> to vector<2x64xf32>
    %164 = vector.extract_strided_slice %159 {offsets = [0, 128], sizes = [2, 64], strides = [1, 1]} : vector<2x192xf32> to vector<2x64xf32>
    %165 = arith.mulf %163, %124 : vector<2x64xf32>
    %166 = arith.mulf %162, %161 : vector<2x64xf32>
    %167 = arith.addf %165, %166 : vector<2x64xf32>
    %168 = math.tanh %167 : vector<2x64xf32>
    %169 = arith.mulf %164, %168 : vector<2x64xf32>
    %170 = arith.addf %127, %169 : vector<2x64xf32>
    %171 = arith.truncf %153 : vector<2x64xf32> to vector<2x64xbf16>
    %172 = arith.truncf %169 : vector<2x64xf32> to vector<2x64xbf16>
    %173 = vector.extract_strided_slice %12 {offsets = [8, 0], sizes = [2, 256], strides = [1, 1]} : vector<16x256xf32> to vector<2x256xf32>
    %cst_41 = arith.constant dense<0.000000e+00> : vector<2x256xf32>
    %174 = tpu.matmul %171, %13, %cst_41 {dimension_numbers = #tpu.dot_dimension_numbers<[1], [0], [0], [1], [0, 0, 1, 1], [], []>} : vector<2x64xbf16>, vector<64x256xbf16>, vector<2x256xf32> -> vector<2x256xf32>
    %175 = arith.addf %173, %174 : vector<2x256xf32>
    %cst_42 = arith.constant dense<0.000000e+00> : vector<2x256xf32>
    %176 = tpu.matmul %171, %14, %cst_42 {dimension_numbers = #tpu.dot_dimension_numbers<[1], [0], [0], [1], [0, 0, 1, 1], [], []>} : vector<2x64xbf16>, vector<64x256xbf16>, vector<2x256xf32> -> vector<2x256xf32>
    %cst_43 = arith.constant dense<0.000000e+00> : vector<2x256xf32>
    %177 = tpu.matmul %172, %15, %cst_43 {dimension_numbers = #tpu.dot_dimension_numbers<[1], [0], [0], [1], [0, 0, 1, 1], [], []>} : vector<2x64xbf16>, vector<64x256xbf16>, vector<2x256xf32> -> vector<2x256xf32>
    %178 = arith.addf %176, %177 : vector<2x256xf32>
    %179 = vector.broadcast %16 : vector<1x256xf32> to vector<2x256xf32>
    %180 = arith.addf %178, %179 : vector<2x256xf32>
    %181 = vector.extract_strided_slice %175 {offsets = [0, 0], sizes = [2, 192], strides = [1, 1]} : vector<2x256xf32> to vector<2x192xf32>
    %182 = arith.negf %181 : vector<2x192xf32>
    %183 = math.exp %182 : vector<2x192xf32>
    %cst_44 = arith.constant 1.000000e+00 : f32
    %184 = vector.broadcast %cst_44 : f32 to vector<2x192xf32>
    %185 = arith.addf %184, %183 : vector<2x192xf32>
    %186 = arith.divf %184, %185 : vector<2x192xf32>
    %187 = vector.extract_strided_slice %175 {offsets = [0, 192], sizes = [2, 64], strides = [1, 1]} : vector<2x256xf32> to vector<2x64xf32>
    %188 = math.tanh %187 : vector<2x64xf32>
    %189 = vector.extract_strided_slice %186 {offsets = [0, 0], sizes = [2, 64], strides = [1, 1]} : vector<2x192xf32> to vector<2x64xf32>
    %190 = vector.extract_strided_slice %186 {offsets = [0, 64], sizes = [2, 64], strides = [1, 1]} : vector<2x192xf32> to vector<2x64xf32>
    %191 = vector.extract_strided_slice %186 {offsets = [0, 128], sizes = [2, 64], strides = [1, 1]} : vector<2x192xf32> to vector<2x64xf32>
    %192 = arith.mulf %190, %151 : vector<2x64xf32>
    %193 = arith.mulf %189, %188 : vector<2x64xf32>
    %194 = arith.addf %192, %193 : vector<2x64xf32>
    %195 = math.tanh %194 : vector<2x64xf32>
    %196 = arith.mulf %191, %195 : vector<2x64xf32>
    %197 = vector.extract_strided_slice %180 {offsets = [0, 0], sizes = [2, 192], strides = [1, 1]} : vector<2x256xf32> to vector<2x192xf32>
    %198 = arith.negf %197 : vector<2x192xf32>
    %199 = math.exp %198 : vector<2x192xf32>
    %cst_45 = arith.constant 1.000000e+00 : f32
    %200 = vector.broadcast %cst_45 : f32 to vector<2x192xf32>
    %201 = arith.addf %200, %199 : vector<2x192xf32>
    %202 = arith.divf %200, %201 : vector<2x192xf32>
    %203 = vector.extract_strided_slice %180 {offsets = [0, 192], sizes = [2, 64], strides = [1, 1]} : vector<2x256xf32> to vector<2x64xf32>
    %204 = math.tanh %203 : vector<2x64xf32>
    %205 = vector.extract_strided_slice %202 {offsets = [0, 0], sizes = [2, 64], strides = [1, 1]} : vector<2x192xf32> to vector<2x64xf32>
    %206 = vector.extract_strided_slice %202 {offsets = [0, 64], sizes = [2, 64], strides = [1, 1]} : vector<2x192xf32> to vector<2x64xf32>
    %207 = vector.extract_strided_slice %202 {offsets = [0, 128], sizes = [2, 64], strides = [1, 1]} : vector<2x192xf32> to vector<2x64xf32>
    %208 = arith.mulf %206, %167 : vector<2x64xf32>
    %209 = arith.mulf %205, %204 : vector<2x64xf32>
    %210 = arith.addf %208, %209 : vector<2x64xf32>
    %211 = math.tanh %210 : vector<2x64xf32>
    %212 = arith.mulf %207, %211 : vector<2x64xf32>
    %213 = arith.addf %170, %212 : vector<2x64xf32>
    %214 = arith.truncf %196 : vector<2x64xf32> to vector<2x64xbf16>
    %215 = arith.truncf %212 : vector<2x64xf32> to vector<2x64xbf16>
    %216 = vector.extract_strided_slice %12 {offsets = [10, 0], sizes = [2, 256], strides = [1, 1]} : vector<16x256xf32> to vector<2x256xf32>
    %cst_46 = arith.constant dense<0.000000e+00> : vector<2x256xf32>
    %217 = tpu.matmul %214, %13, %cst_46 {dimension_numbers = #tpu.dot_dimension_numbers<[1], [0], [0], [1], [0, 0, 1, 1], [], []>} : vector<2x64xbf16>, vector<64x256xbf16>, vector<2x256xf32> -> vector<2x256xf32>
    %218 = arith.addf %216, %217 : vector<2x256xf32>
    %cst_47 = arith.constant dense<0.000000e+00> : vector<2x256xf32>
    %219 = tpu.matmul %214, %14, %cst_47 {dimension_numbers = #tpu.dot_dimension_numbers<[1], [0], [0], [1], [0, 0, 1, 1], [], []>} : vector<2x64xbf16>, vector<64x256xbf16>, vector<2x256xf32> -> vector<2x256xf32>
    %cst_48 = arith.constant dense<0.000000e+00> : vector<2x256xf32>
    %220 = tpu.matmul %215, %15, %cst_48 {dimension_numbers = #tpu.dot_dimension_numbers<[1], [0], [0], [1], [0, 0, 1, 1], [], []>} : vector<2x64xbf16>, vector<64x256xbf16>, vector<2x256xf32> -> vector<2x256xf32>
    %221 = arith.addf %219, %220 : vector<2x256xf32>
    %222 = vector.broadcast %16 : vector<1x256xf32> to vector<2x256xf32>
    %223 = arith.addf %221, %222 : vector<2x256xf32>
    %224 = vector.extract_strided_slice %218 {offsets = [0, 0], sizes = [2, 192], strides = [1, 1]} : vector<2x256xf32> to vector<2x192xf32>
    %225 = arith.negf %224 : vector<2x192xf32>
    %226 = math.exp %225 : vector<2x192xf32>
    %cst_49 = arith.constant 1.000000e+00 : f32
    %227 = vector.broadcast %cst_49 : f32 to vector<2x192xf32>
    %228 = arith.addf %227, %226 : vector<2x192xf32>
    %229 = arith.divf %227, %228 : vector<2x192xf32>
    %230 = vector.extract_strided_slice %218 {offsets = [0, 192], sizes = [2, 64], strides = [1, 1]} : vector<2x256xf32> to vector<2x64xf32>
    %231 = math.tanh %230 : vector<2x64xf32>
    %232 = vector.extract_strided_slice %229 {offsets = [0, 0], sizes = [2, 64], strides = [1, 1]} : vector<2x192xf32> to vector<2x64xf32>
    %233 = vector.extract_strided_slice %229 {offsets = [0, 64], sizes = [2, 64], strides = [1, 1]} : vector<2x192xf32> to vector<2x64xf32>
    %234 = vector.extract_strided_slice %229 {offsets = [0, 128], sizes = [2, 64], strides = [1, 1]} : vector<2x192xf32> to vector<2x64xf32>
    %235 = arith.mulf %233, %194 : vector<2x64xf32>
    %236 = arith.mulf %232, %231 : vector<2x64xf32>
    %237 = arith.addf %235, %236 : vector<2x64xf32>
    %238 = math.tanh %237 : vector<2x64xf32>
    %239 = arith.mulf %234, %238 : vector<2x64xf32>
    %240 = vector.extract_strided_slice %223 {offsets = [0, 0], sizes = [2, 192], strides = [1, 1]} : vector<2x256xf32> to vector<2x192xf32>
    %241 = arith.negf %240 : vector<2x192xf32>
    %242 = math.exp %241 : vector<2x192xf32>
    %cst_50 = arith.constant 1.000000e+00 : f32
    %243 = vector.broadcast %cst_50 : f32 to vector<2x192xf32>
    %244 = arith.addf %243, %242 : vector<2x192xf32>
    %245 = arith.divf %243, %244 : vector<2x192xf32>
    %246 = vector.extract_strided_slice %223 {offsets = [0, 192], sizes = [2, 64], strides = [1, 1]} : vector<2x256xf32> to vector<2x64xf32>
    %247 = math.tanh %246 : vector<2x64xf32>
    %248 = vector.extract_strided_slice %245 {offsets = [0, 0], sizes = [2, 64], strides = [1, 1]} : vector<2x192xf32> to vector<2x64xf32>
    %249 = vector.extract_strided_slice %245 {offsets = [0, 64], sizes = [2, 64], strides = [1, 1]} : vector<2x192xf32> to vector<2x64xf32>
    %250 = vector.extract_strided_slice %245 {offsets = [0, 128], sizes = [2, 64], strides = [1, 1]} : vector<2x192xf32> to vector<2x64xf32>
    %251 = arith.mulf %249, %210 : vector<2x64xf32>
    %252 = arith.mulf %248, %247 : vector<2x64xf32>
    %253 = arith.addf %251, %252 : vector<2x64xf32>
    %254 = math.tanh %253 : vector<2x64xf32>
    %255 = arith.mulf %250, %254 : vector<2x64xf32>
    %256 = arith.addf %213, %255 : vector<2x64xf32>
    %257 = arith.truncf %239 : vector<2x64xf32> to vector<2x64xbf16>
    %258 = arith.truncf %255 : vector<2x64xf32> to vector<2x64xbf16>
    %259 = vector.extract_strided_slice %12 {offsets = [12, 0], sizes = [2, 256], strides = [1, 1]} : vector<16x256xf32> to vector<2x256xf32>
    %cst_51 = arith.constant dense<0.000000e+00> : vector<2x256xf32>
    %260 = tpu.matmul %257, %13, %cst_51 {dimension_numbers = #tpu.dot_dimension_numbers<[1], [0], [0], [1], [0, 0, 1, 1], [], []>} : vector<2x64xbf16>, vector<64x256xbf16>, vector<2x256xf32> -> vector<2x256xf32>
    %261 = arith.addf %259, %260 : vector<2x256xf32>
    %cst_52 = arith.constant dense<0.000000e+00> : vector<2x256xf32>
    %262 = tpu.matmul %257, %14, %cst_52 {dimension_numbers = #tpu.dot_dimension_numbers<[1], [0], [0], [1], [0, 0, 1, 1], [], []>} : vector<2x64xbf16>, vector<64x256xbf16>, vector<2x256xf32> -> vector<2x256xf32>
    %cst_53 = arith.constant dense<0.000000e+00> : vector<2x256xf32>
    %263 = tpu.matmul %258, %15, %cst_53 {dimension_numbers = #tpu.dot_dimension_numbers<[1], [0], [0], [1], [0, 0, 1, 1], [], []>} : vector<2x64xbf16>, vector<64x256xbf16>, vector<2x256xf32> -> vector<2x256xf32>
    %264 = arith.addf %262, %263 : vector<2x256xf32>
    %265 = vector.broadcast %16 : vector<1x256xf32> to vector<2x256xf32>
    %266 = arith.addf %264, %265 : vector<2x256xf32>
    %267 = vector.extract_strided_slice %261 {offsets = [0, 0], sizes = [2, 192], strides = [1, 1]} : vector<2x256xf32> to vector<2x192xf32>
    %268 = arith.negf %267 : vector<2x192xf32>
    %269 = math.exp %268 : vector<2x192xf32>
    %cst_54 = arith.constant 1.000000e+00 : f32
    %270 = vector.broadcast %cst_54 : f32 to vector<2x192xf32>
    %271 = arith.addf %270, %269 : vector<2x192xf32>
    %272 = arith.divf %270, %271 : vector<2x192xf32>
    %273 = vector.extract_strided_slice %261 {offsets = [0, 192], sizes = [2, 64], strides = [1, 1]} : vector<2x256xf32> to vector<2x64xf32>
    %274 = math.tanh %273 : vector<2x64xf32>
    %275 = vector.extract_strided_slice %272 {offsets = [0, 0], sizes = [2, 64], strides = [1, 1]} : vector<2x192xf32> to vector<2x64xf32>
    %276 = vector.extract_strided_slice %272 {offsets = [0, 64], sizes = [2, 64], strides = [1, 1]} : vector<2x192xf32> to vector<2x64xf32>
    %277 = vector.extract_strided_slice %272 {offsets = [0, 128], sizes = [2, 64], strides = [1, 1]} : vector<2x192xf32> to vector<2x64xf32>
    %278 = arith.mulf %276, %237 : vector<2x64xf32>
    %279 = arith.mulf %275, %274 : vector<2x64xf32>
    %280 = arith.addf %278, %279 : vector<2x64xf32>
    %281 = math.tanh %280 : vector<2x64xf32>
    %282 = arith.mulf %277, %281 : vector<2x64xf32>
    %283 = vector.extract_strided_slice %266 {offsets = [0, 0], sizes = [2, 192], strides = [1, 1]} : vector<2x256xf32> to vector<2x192xf32>
    %284 = arith.negf %283 : vector<2x192xf32>
    %285 = math.exp %284 : vector<2x192xf32>
    %cst_55 = arith.constant 1.000000e+00 : f32
    %286 = vector.broadcast %cst_55 : f32 to vector<2x192xf32>
    %287 = arith.addf %286, %285 : vector<2x192xf32>
    %288 = arith.divf %286, %287 : vector<2x192xf32>
    %289 = vector.extract_strided_slice %266 {offsets = [0, 192], sizes = [2, 64], strides = [1, 1]} : vector<2x256xf32> to vector<2x64xf32>
    %290 = math.tanh %289 : vector<2x64xf32>
    %291 = vector.extract_strided_slice %288 {offsets = [0, 0], sizes = [2, 64], strides = [1, 1]} : vector<2x192xf32> to vector<2x64xf32>
    %292 = vector.extract_strided_slice %288 {offsets = [0, 64], sizes = [2, 64], strides = [1, 1]} : vector<2x192xf32> to vector<2x64xf32>
    %293 = vector.extract_strided_slice %288 {offsets = [0, 128], sizes = [2, 64], strides = [1, 1]} : vector<2x192xf32> to vector<2x64xf32>
    %294 = arith.mulf %292, %253 : vector<2x64xf32>
    %295 = arith.mulf %291, %290 : vector<2x64xf32>
    %296 = arith.addf %294, %295 : vector<2x64xf32>
    %297 = math.tanh %296 : vector<2x64xf32>
    %298 = arith.mulf %293, %297 : vector<2x64xf32>
    %299 = arith.addf %256, %298 : vector<2x64xf32>
    %300 = arith.truncf %282 : vector<2x64xf32> to vector<2x64xbf16>
    %301 = arith.truncf %298 : vector<2x64xf32> to vector<2x64xbf16>
    %302 = vector.extract_strided_slice %12 {offsets = [14, 0], sizes = [2, 256], strides = [1, 1]} : vector<16x256xf32> to vector<2x256xf32>
    %cst_56 = arith.constant dense<0.000000e+00> : vector<2x256xf32>
    %303 = tpu.matmul %300, %13, %cst_56 {dimension_numbers = #tpu.dot_dimension_numbers<[1], [0], [0], [1], [0, 0, 1, 1], [], []>} : vector<2x64xbf16>, vector<64x256xbf16>, vector<2x256xf32> -> vector<2x256xf32>
    %304 = arith.addf %302, %303 : vector<2x256xf32>
    %cst_57 = arith.constant dense<0.000000e+00> : vector<2x256xf32>
    %305 = tpu.matmul %300, %14, %cst_57 {dimension_numbers = #tpu.dot_dimension_numbers<[1], [0], [0], [1], [0, 0, 1, 1], [], []>} : vector<2x64xbf16>, vector<64x256xbf16>, vector<2x256xf32> -> vector<2x256xf32>
    %cst_58 = arith.constant dense<0.000000e+00> : vector<2x256xf32>
    %306 = tpu.matmul %301, %15, %cst_58 {dimension_numbers = #tpu.dot_dimension_numbers<[1], [0], [0], [1], [0, 0, 1, 1], [], []>} : vector<2x64xbf16>, vector<64x256xbf16>, vector<2x256xf32> -> vector<2x256xf32>
    %307 = arith.addf %305, %306 : vector<2x256xf32>
    %308 = vector.broadcast %16 : vector<1x256xf32> to vector<2x256xf32>
    %309 = arith.addf %307, %308 : vector<2x256xf32>
    %310 = vector.extract_strided_slice %304 {offsets = [0, 0], sizes = [2, 192], strides = [1, 1]} : vector<2x256xf32> to vector<2x192xf32>
    %311 = arith.negf %310 : vector<2x192xf32>
    %312 = math.exp %311 : vector<2x192xf32>
    %cst_59 = arith.constant 1.000000e+00 : f32
    %313 = vector.broadcast %cst_59 : f32 to vector<2x192xf32>
    %314 = arith.addf %313, %312 : vector<2x192xf32>
    %315 = arith.divf %313, %314 : vector<2x192xf32>
    %316 = vector.extract_strided_slice %304 {offsets = [0, 192], sizes = [2, 64], strides = [1, 1]} : vector<2x256xf32> to vector<2x64xf32>
    %317 = math.tanh %316 : vector<2x64xf32>
    %318 = vector.extract_strided_slice %315 {offsets = [0, 0], sizes = [2, 64], strides = [1, 1]} : vector<2x192xf32> to vector<2x64xf32>
    %319 = vector.extract_strided_slice %315 {offsets = [0, 64], sizes = [2, 64], strides = [1, 1]} : vector<2x192xf32> to vector<2x64xf32>
    %320 = vector.extract_strided_slice %315 {offsets = [0, 128], sizes = [2, 64], strides = [1, 1]} : vector<2x192xf32> to vector<2x64xf32>
    %321 = arith.mulf %319, %280 : vector<2x64xf32>
    %322 = arith.mulf %318, %317 : vector<2x64xf32>
    %323 = arith.addf %321, %322 : vector<2x64xf32>
    %324 = math.tanh %323 : vector<2x64xf32>
    %325 = arith.mulf %320, %324 : vector<2x64xf32>
    %326 = vector.extract_strided_slice %309 {offsets = [0, 0], sizes = [2, 192], strides = [1, 1]} : vector<2x256xf32> to vector<2x192xf32>
    %327 = arith.negf %326 : vector<2x192xf32>
    %328 = math.exp %327 : vector<2x192xf32>
    %cst_60 = arith.constant 1.000000e+00 : f32
    %329 = vector.broadcast %cst_60 : f32 to vector<2x192xf32>
    %330 = arith.addf %329, %328 : vector<2x192xf32>
    %331 = arith.divf %329, %330 : vector<2x192xf32>
    %332 = vector.extract_strided_slice %309 {offsets = [0, 192], sizes = [2, 64], strides = [1, 1]} : vector<2x256xf32> to vector<2x64xf32>
    %333 = math.tanh %332 : vector<2x64xf32>
    %334 = vector.extract_strided_slice %331 {offsets = [0, 0], sizes = [2, 64], strides = [1, 1]} : vector<2x192xf32> to vector<2x64xf32>
    %335 = vector.extract_strided_slice %331 {offsets = [0, 64], sizes = [2, 64], strides = [1, 1]} : vector<2x192xf32> to vector<2x64xf32>
    %336 = vector.extract_strided_slice %331 {offsets = [0, 128], sizes = [2, 64], strides = [1, 1]} : vector<2x192xf32> to vector<2x64xf32>
    %337 = arith.mulf %335, %296 : vector<2x64xf32>
    %338 = arith.mulf %334, %333 : vector<2x64xf32>
    %339 = arith.addf %337, %338 : vector<2x64xf32>
    %340 = math.tanh %339 : vector<2x64xf32>
    %341 = arith.mulf %336, %340 : vector<2x64xf32>
    %342 = arith.addf %299, %341 : vector<2x64xf32>
    %343 = arith.truncf %325 : vector<2x64xf32> to vector<2x64xbf16>
    %344 = arith.truncf %341 : vector<2x64xf32> to vector<2x64xbf16>
    %cst_61 = arith.constant dense<0.000000e+00> : vector<2x256xf32>
    %345 = tpu.matmul %343, %14, %cst_61 {dimension_numbers = #tpu.dot_dimension_numbers<[1], [0], [0], [1], [0, 0, 1, 1], [], []>} : vector<2x64xbf16>, vector<64x256xbf16>, vector<2x256xf32> -> vector<2x256xf32>
    %cst_62 = arith.constant dense<0.000000e+00> : vector<2x256xf32>
    %346 = tpu.matmul %344, %15, %cst_62 {dimension_numbers = #tpu.dot_dimension_numbers<[1], [0], [0], [1], [0, 0, 1, 1], [], []>} : vector<2x64xbf16>, vector<64x256xbf16>, vector<2x256xf32> -> vector<2x256xf32>
    %347 = arith.addf %345, %346 : vector<2x256xf32>
    %348 = vector.broadcast %16 : vector<1x256xf32> to vector<2x256xf32>
    %349 = arith.addf %347, %348 : vector<2x256xf32>
    %350 = vector.extract_strided_slice %349 {offsets = [0, 0], sizes = [2, 192], strides = [1, 1]} : vector<2x256xf32> to vector<2x192xf32>
    %351 = arith.negf %350 : vector<2x192xf32>
    %352 = math.exp %351 : vector<2x192xf32>
    %cst_63 = arith.constant 1.000000e+00 : f32
    %353 = vector.broadcast %cst_63 : f32 to vector<2x192xf32>
    %354 = arith.addf %353, %352 : vector<2x192xf32>
    %355 = arith.divf %353, %354 : vector<2x192xf32>
    %356 = vector.extract_strided_slice %349 {offsets = [0, 192], sizes = [2, 64], strides = [1, 1]} : vector<2x256xf32> to vector<2x64xf32>
    %357 = math.tanh %356 : vector<2x64xf32>
    %358 = vector.extract_strided_slice %355 {offsets = [0, 0], sizes = [2, 64], strides = [1, 1]} : vector<2x192xf32> to vector<2x64xf32>
    %359 = vector.extract_strided_slice %355 {offsets = [0, 64], sizes = [2, 64], strides = [1, 1]} : vector<2x192xf32> to vector<2x64xf32>
    %360 = vector.extract_strided_slice %355 {offsets = [0, 128], sizes = [2, 64], strides = [1, 1]} : vector<2x192xf32> to vector<2x64xf32>
    %361 = arith.mulf %359, %339 : vector<2x64xf32>
    %362 = arith.mulf %358, %357 : vector<2x64xf32>
    %363 = arith.addf %361, %362 : vector<2x64xf32>
    %364 = math.tanh %363 : vector<2x64xf32>
    %365 = arith.mulf %360, %364 : vector<2x64xf32>
    %366 = arith.addf %342, %365 : vector<2x64xf32>
    %c0_64 = arith.constant 0 : index
    %c0_65 = arith.constant 0 : index
    %367 = vector.load %arg10[%c0_64, %c0_65] : memref<64x10xf32, #tpu.memory_space<vmem>>, vector<64x10xf32>
    %cst_66 = arith.constant dense<0.000000e+00> : vector<2x10xf32>
    %368 = tpu.matmul %366, %367, %cst_66 {dimension_numbers = #tpu.dot_dimension_numbers<[1], [0], [0], [1], [0, 0, 1, 1], [], []>} : vector<2x64xf32>, vector<64x10xf32>, vector<2x10xf32> -> vector<2x10xf32>
    %c0_67 = arith.constant 0 : index
    %c0_68 = arith.constant 0 : index
    %369 = vector.load %arg11[%c0_67, %c0_68] : memref<1x10xf32, #tpu.memory_space<vmem>>, vector<1x10xf32>
    %370 = vector.broadcast %369 : vector<1x10xf32> to vector<2x10xf32>
    %371 = arith.addf %368, %370 : vector<2x10xf32>
    %cst_69 = arith.constant dense<0xFF800000> : vector<2xf32>
    %372 = vector.multi_reduction <maximumf>, %371, %cst_69 [1] : vector<2x10xf32> to vector<2xf32>
    %373 = vector.shape_cast %372 : vector<2xf32> to vector<2x1xf32>
    %374 = vector.broadcast %373 : vector<2x1xf32> to vector<2x10xf32>
    %375 = arith.subf %371, %374 : vector<2x10xf32>
    %376 = math.exp %375 : vector<2x10xf32>
    %cst_70 = arith.constant dense<0.000000e+00> : vector<2xf32>
    %377 = vector.multi_reduction <add>, %376, %cst_70 [1] : vector<2x10xf32> to vector<2xf32>
    %378 = vector.shape_cast %377 : vector<2xf32> to vector<2x1xf32>
    %379 = tpu.reciprocal %378 {approx = true} : vector<2x1xf32> -> vector<2x1xf32>
    %380 = vector.broadcast %379 : vector<2x1xf32> to vector<2x10xf32>
    %381 = arith.mulf %376, %380 : vector<2x10xf32>
    %c0_71 = arith.constant 0 : index
    %c0_72 = arith.constant 0 : index
    %c0_73 = arith.constant 0 : index
    %382 = vector.load %arg12[%c0_71, %c0_72, %c0_73] : memref<1x2x10xf32, #tpu.memory_space<vmem>>, vector<1x2x10xf32>
    %383 = vector.shape_cast %382 : vector<1x2x10xf32> to vector<2x10xf32>
    %384 = vector.shape_cast %381 : vector<2x10xf32> to vector<1x2x10xf32>
    tpu.vector_store %arg12[%c0_71, %c0_72, %c0_73], %384 {strides = array<i32>} : memref<1x2x10xf32, #tpu.memory_space<vmem>>, vector<1x2x10xf32>,
    return
  }
  func.func @transform_0(%arg0: i32) -> (i32, i32, i32) {
    %c0_i32 = arith.constant 0 : i32
    %c0_i32_0 = arith.constant 0 : i32
    %c0_i32_1 = arith.constant 0 : i32
    return %arg0, %c0_i32, %c0_i32_0 : i32, i32, i32
  }
  func.func @transform_1(%arg0: i32) -> (i32, i32) {
    %c0_i32 = arith.constant 0 : i32
    %c0_i32_0 = arith.constant 0 : i32
    %c0_i32_1 = arith.constant 0 : i32
    return %c0_i32, %c0_i32_0 : i32, i32
  }
  func.func @transform_2(%arg0: i32) -> (i32, i32) {
    %c0_i32 = arith.constant 0 : i32
    %c0_i32_0 = arith.constant 0 : i32
    %c0_i32_1 = arith.constant 0 : i32
    return %c0_i32, %c0_i32_0 : i32, i32
  }
  func.func @transform_3(%arg0: i32) -> (i32, i32) {
    %c0_i32 = arith.constant 0 : i32
    %c0_i32_0 = arith.constant 0 : i32
    %c0_i32_1 = arith.constant 0 : i32
    return %c0_i32, %c0_i32_0 : i32, i32
  }
  func.func @transform_4(%arg0: i32) -> (i32, i32) {
    %c0_i32 = arith.constant 0 : i32
    %c0_i32_0 = arith.constant 0 : i32
    %c0_i32_1 = arith.constant 0 : i32
    return %c0_i32, %c0_i32_0 : i32, i32
  }
  func.func @transform_5(%arg0: i32) -> (i32, i32) {
    %c0_i32 = arith.constant 0 : i32
    %c0_i32_0 = arith.constant 0 : i32
    %c0_i32_1 = arith.constant 0 : i32
    return %c0_i32, %c0_i32_0 : i32, i32
  }
  func.func @transform_6(%arg0: i32) -> (i32, i32) {
    %c0_i32 = arith.constant 0 : i32
    %c0_i32_0 = arith.constant 0 : i32
    %c0_i32_1 = arith.constant 0 : i32
    return %c0_i32, %c0_i32_0 : i32, i32
  }
  func.func @transform_7(%arg0: i32) -> (i32, i32) {
    %c0_i32 = arith.constant 0 : i32
    %c0_i32_0 = arith.constant 0 : i32
    %c0_i32_1 = arith.constant 0 : i32
    return %c0_i32, %c0_i32_0 : i32, i32
  }
  func.func @transform_8(%arg0: i32) -> (i32, i32) {
    %c0_i32 = arith.constant 0 : i32
    %c0_i32_0 = arith.constant 0 : i32
    %c0_i32_1 = arith.constant 0 : i32
    return %c0_i32, %c0_i32_0 : i32, i32
  }
  func.func @transform_9(%arg0: i32) -> (i32, i32) {
    %c0_i32 = arith.constant 0 : i32
    %c0_i32_0 = arith.constant 0 : i32
    %c0_i32_1 = arith.constant 0 : i32
    return %c0_i32, %c0_i32_0 : i32, i32
  }
  func.func @transform_10(%arg0: i32) -> (i32, i32) {
    %c0_i32 = arith.constant 0 : i32
    %c0_i32_0 = arith.constant 0 : i32
    %c0_i32_1 = arith.constant 0 : i32
    return %c0_i32, %c0_i32_0 : i32, i32
  }
  func.func @transform_11(%arg0: i32) -> (i32, i32, i32) {
    %c0_i32 = arith.constant 0 : i32
    %c0_i32_0 = arith.constant 0 : i32
    %c0_i32_1 = arith.constant 0 : i32
    return %arg0, %c0_i32, %c0_i32_0 : i32, i32, i32
  }
}

</mosaic_0001>

<llo_original>
// kernel: efficientnet_lstm_forward.1
$region0: #{efficientnet_lstm_forward.1}
  #allocation0 [shape = 'u32[]', space=smem, size = 0x4, offset = 0x4, fixed_abs, tag = 'smem constant byte address 0x4 - core index']
  #allocation1 [shape = 'u32[72,128]{1,0:T(1,128)}', space=vmem, size = 0x9000, scoped, tag = 'internal scratch']
  %s0 = inlined_call_operand.vmem [shape: bf16[1,16,768], index: 0, kind: input, shape index: {}]
  %s1 = inlined_call_operand.vmem [shape: bf16[768,128], index: 1, kind: input, shape index: {}]
  %s2 = inlined_call_operand.vmem [shape: f32[1,128], index: 2, kind: input, shape index: {}]
  %s3 = inlined_call_operand.vmem [shape: bf16[128,256], index: 3, kind: input, shape index: {}]
  %s4 = inlined_call_operand.vmem [shape: bf16[64,256], index: 4, kind: input, shape index: {}]
  %s5 = inlined_call_operand.vmem [shape: f32[1,256], index: 5, kind: input, shape index: {}]
  %s6 = inlined_call_operand.vmem [shape: bf16[64,256], index: 6, kind: input, shape index: {}]
  %s7 = inlined_call_operand.vmem [shape: bf16[64,256], index: 7, kind: input, shape index: {}]
  %s8 = inlined_call_operand.vmem [shape: f32[1,256], index: 8, kind: input, shape index: {}]
  %s9 = inlined_call_operand.vmem [shape: f32[64,10], index: 9, kind: input, shape index: {}]
  %s10 = inlined_call_operand.vmem [shape: f32[1,10], index: 10, kind: input, shape index: {}]
  %s11 = inlined_call_operand.hbm [shape: f32[1,2,10], index: 11, kind: output, shape index: {}]
  %s12 = sld [smem:[#allocation0]]
  $region54: #{efficientnet_lstm_forward.1} parent=0
    _
  %s14 = ssub.s32 1, %s12
  %s15 = scalar_select 0, %s14, %s12
  $region1: #{efficientnet_lstm_forward.1} parent=0
    #allocation2 [shape = 'u8[1024]{0}', space=vmem, size = 0x400, scoped, tag = 'output window, operand 0, single buffered']
    #allocation3 [shape = 's32[1]{0}', space=sflag, size = 0x4, scoped, tag = 'scoped memory for efficientnet_lstm_forward.1']
    %16 = vsyncpa [#allocation3], 0
    // Predicated region
    $region2: #{efficientnet_lstm_forward.1} parent=1 // pred_check
      _
    $region3: #{efficientnet_lstm_forward.1} parent=1 // pred_check_branch
      %18 = sbr.rel (0) target = $region5
    $region4: #{efficientnet_lstm_forward.1} parent=1 // pred_region
      _
    $region5: #{efficientnet_lstm_forward.1} parent=1 // pred_fallthru
      _
    // Predicated region
    $region6: #{efficientnet_lstm_forward.1} parent=1 // pred_check
      _
    $region7: #{efficientnet_lstm_forward.1} parent=1 // pred_check_branch
      %20 = sbr.rel (0) target = $region9
    $region8: #{efficientnet_lstm_forward.1} parent=1 // pred_region
      _
    $region9: #{efficientnet_lstm_forward.1} parent=1 // pred_fallthru
      _
    // Predicated region
    $region10: #{efficientnet_lstm_forward.1} parent=1 // pred_check
      _
    $region11: #{efficientnet_lstm_forward.1} parent=1 // pred_check_branch
      %22 = sbr.rel (0) target = $region13
    $region12: #{efficientnet_lstm_forward.1} parent=1 // pred_region
      _
    $region13: #{efficientnet_lstm_forward.1} parent=1 // pred_fallthru
      _
    // Predicated region
    $region14: #{efficientnet_lstm_forward.1} parent=1 // pred_check
      _
    $region15: #{efficientnet_lstm_forward.1} parent=1 // pred_check_branch
      %24 = sbr.rel (0) target = $region17
    $region16: #{efficientnet_lstm_forward.1} parent=1 // pred_region
      _
    $region17: #{efficientnet_lstm_forward.1} parent=1 // pred_fallthru
      _
    // Predicated region
    $region18: #{efficientnet_lstm_forward.1} parent=1 // pred_check
      _
    $region19: #{efficientnet_lstm_forward.1} parent=1 // pred_check_branch
      %26 = sbr.rel (0) target = $region21
    $region20: #{efficientnet_lstm_forward.1} parent=1 // pred_region
      _
    $region21: #{efficientnet_lstm_forward.1} parent=1 // pred_fallthru
      _
    // Predicated region
    $region22: #{efficientnet_lstm_forward.1} parent=1 // pred_check
      _
    $region23: #{efficientnet_lstm_forward.1} parent=1 // pred_check_branch
      %28 = sbr.rel (0) target = $region25
    $region24: #{efficientnet_lstm_forward.1} parent=1 // pred_region
      _
    $region25: #{efficientnet_lstm_forward.1} parent=1 // pred_fallthru
      _
    // Predicated region
    $region26: #{efficientnet_lstm_forward.1} parent=1 // pred_check
      _
    $region27: #{efficientnet_lstm_forward.1} parent=1 // pred_check_branch
      %30 = sbr.rel (0) target = $region29
    $region28: #{efficientnet_lstm_forward.1} parent=1 // pred_region
      _
    $region29: #{efficientnet_lstm_forward.1} parent=1 // pred_fallthru
      _
    // Predicated region
    $region30: #{efficientnet_lstm_forward.1} parent=1 // pred_check
      _
    $region31: #{efficientnet_lstm_forward.1} parent=1 // pred_check_branch
      %32 = sbr.rel (0) target = $region33
    $region32: #{efficientnet_lstm_forward.1} parent=1 // pred_region
      _
    $region33: #{efficientnet_lstm_forward.1} parent=1 // pred_fallthru
      _
    // Predicated region
    $region34: #{efficientnet_lstm_forward.1} parent=1 // pred_check
      _
    $region35: #{efficientnet_lstm_forward.1} parent=1 // pred_check_branch
      %34 = sbr.rel (0) target = $region37
    $region36: #{efficientnet_lstm_forward.1} parent=1 // pred_region
      _
    $region37: #{efficientnet_lstm_forward.1} parent=1 // pred_fallthru
      _
    // Predicated region
    $region38: #{efficientnet_lstm_forward.1} parent=1 // pred_check
      _
    $region39: #{efficientnet_lstm_forward.1} parent=1 // pred_check_branch
      %36 = sbr.rel (0) target = $region41
    $region40: #{efficientnet_lstm_forward.1} parent=1 // pred_region
      _
    $region41: #{efficientnet_lstm_forward.1} parent=1 // pred_fallthru
      _
    // Predicated region
    $region42: #{efficientnet_lstm_forward.1} parent=1 // pred_check
      _
    $region43: #{efficientnet_lstm_forward.1} parent=1 // pred_check_branch
      %38 = sbr.rel (0) target = $region45
    $region44: #{efficientnet_lstm_forward.1} parent=1 // pred_region
      _
    $region45: #{efficientnet_lstm_forward.1} parent=1 // pred_fallthru
      _
    %v40 = vld [vmem:[%s0] sm:$0xff]
    %v41 = vld [vmem:[%s0 + $0x8] sm:$0xff]
    %v42 = vld [vmem:[%s0 + $0x10] sm:$0xff]
    %v43 = vld [vmem:[%s0 + $0x18] sm:$0xff]
    %v44 = vld [vmem:[%s0 + $0x20] sm:$0xff]
    %v45 = vld [vmem:[%s0 + $0x28] sm:$0xff]
    %v46 = vld [vmem:[%s1] sm:$0xf]
    %v47 = vld [vmem:[%s1 + $0x4] sm:$0xf]
    %v48 = vld [vmem:[%s1 + $0x8] sm:$0xf]
    %v49 = vld [vmem:[%s1 + $0xc] sm:$0xf]
    %v50 = vld [vmem:[%s1 + $0x10] sm:$0xf]
    %v51 = vld [vmem:[%s1 + $0x14] sm:$0xf]
    %v52 = vld [vmem:[%s1 + $0x18] sm:$0xf]
    %v53 = vld [vmem:[%s1 + $0x1c] sm:$0xf]
    %v54 = vld [vmem:[%s1 + $0x20] sm:$0xf]
    %v55 = vld [vmem:[%s1 + $0x24] sm:$0xf]
    %v56 = vld [vmem:[%s1 + $0x28] sm:$0xf]
    %v57 = vld [vmem:[%s1 + $0x2c] sm:$0xf]
    %v58 = vld [vmem:[%s1 + $0x30] sm:$0xf]
    %v59 = vld [vmem:[%s1 + $0x34] sm:$0xf]
    %v60 = vld [vmem:[%s1 + $0x38] sm:$0xf]
    %v61 = vld [vmem:[%s1 + $0x3c] sm:$0xf]
    %v62 = vld [vmem:[%s1 + $0x40] sm:$0xf]
    %v63 = vld [vmem:[%s1 + $0x44] sm:$0xf]
    %v64 = vld [vmem:[%s1 + $0x48] sm:$0xf]
    %v65 = vld [vmem:[%s1 + $0x4c] sm:$0xf]
    %v66 = vld [vmem:[%s1 + $0x50] sm:$0xf]
    %v67 = vld [vmem:[%s1 + $0x54] sm:$0xf]
    %v68 = vld [vmem:[%s1 + $0x58] sm:$0xf]
    %v69 = vld [vmem:[%s1 + $0x5c] sm:$0xf]
    %v70 = vld [vmem:[%s1 + $0x60] sm:$0xf]
    %v71 = vld [vmem:[%s1 + $0x64] sm:$0xf]
    %v72 = vld [vmem:[%s1 + $0x68] sm:$0xf]
    %v73 = vld [vmem:[%s1 + $0x6c] sm:$0xf]
    %v74 = vld [vmem:[%s1 + $0x70] sm:$0xf]
    %v75 = vld [vmem:[%s1 + $0x74] sm:$0xf]
    %v76 = vld [vmem:[%s1 + $0x78] sm:$0xf]
    %v77 = vld [vmem:[%s1 + $0x7c] sm:$0xf]
    %v78 = vld [vmem:[%s1 + $0x80] sm:$0xf]
    %v79 = vld [vmem:[%s1 + $0x84] sm:$0xf]
    %v80 = vld [vmem:[%s1 + $0x88] sm:$0xf]
    %v81 = vld [vmem:[%s1 + $0x8c] sm:$0xf]
    %v82 = vld [vmem:[%s1 + $0x90] sm:$0xf]
    %v83 = vld [vmem:[%s1 + $0x94] sm:$0xf]
    %v84 = vld [vmem:[%s1 + $0x98] sm:$0xf]
    %v85 = vld [vmem:[%s1 + $0x9c] sm:$0xf]
    %v86 = vld [vmem:[%s1 + $0xa0] sm:$0xf]
    %v87 = vld [vmem:[%s1 + $0xa4] sm:$0xf]
    %v88 = vld [vmem:[%s1 + $0xa8] sm:$0xf]
    %v89 = vld [vmem:[%s1 + $0xac] sm:$0xf]
    %v90 = vld [vmem:[%s1 + $0xb0] sm:$0xf]
    %v91 = vld [vmem:[%s1 + $0xb4] sm:$0xf]
    %v92 = vld [vmem:[%s1 + $0xb8] sm:$0xf]
    %v93 = vld [vmem:[%s1 + $0xbc] sm:$0xf]
    %v94 = vld [vmem:[%s1 + $0xc0] sm:$0xf]
    %v95 = vld [vmem:[%s1 + $0xc4] sm:$0xf]
    %v96 = vld [vmem:[%s1 + $0xc8] sm:$0xf]
    %v97 = vld [vmem:[%s1 + $0xcc] sm:$0xf]
    %v98 = vld [vmem:[%s1 + $0xd0] sm:$0xf]
    %v99 = vld [vmem:[%s1 + $0xd4] sm:$0xf]
    %v100 = vld [vmem:[%s1 + $0xd8] sm:$0xf]
    %v101 = vld [vmem:[%s1 + $0xdc] sm:$0xf]
    %v102 = vld [vmem:[%s1 + $0xe0] sm:$0xf]
    %v103 = vld [vmem:[%s1 + $0xe4] sm:$0xf]
    %v104 = vld [vmem:[%s1 + $0xe8] sm:$0xf]
    %v105 = vld [vmem:[%s1 + $0xec] sm:$0xf]
    %v106 = vld [vmem:[%s1 + $0xf0] sm:$0xf]
    %v107 = vld [vmem:[%s1 + $0xf4] sm:$0xf]
    %v108 = vld [vmem:[%s1 + $0xf8] sm:$0xf]
    %v109 = vld [vmem:[%s1 + $0xfc] sm:$0xf]
    %v110 = vld [vmem:[%s1 + $0x100] sm:$0xf]
    %v111 = vld [vmem:[%s1 + $0x104] sm:$0xf]
    %v112 = vld [vmem:[%s1 + $0x108] sm:$0xf]
    %v113 = vld [vmem:[%s1 + $0x10c] sm:$0xf]
    %v114 = vld [vmem:[%s1 + $0x110] sm:$0xf]
    %v115 = vld [vmem:[%s1 + $0x114] sm:$0xf]
    %v116 = vld [vmem:[%s1 + $0x118] sm:$0xf]
    %v117 = vld [vmem:[%s1 + $0x11c] sm:$0xf]
    %v118 = vld [vmem:[%s1 + $0x120] sm:$0xf]
    %v119 = vld [vmem:[%s1 + $0x124] sm:$0xf]
    %v120 = vld [vmem:[%s1 + $0x128] sm:$0xf]
    %v121 = vld [vmem:[%s1 + $0x12c] sm:$0xf]
    %v122 = vld [vmem:[%s1 + $0x130] sm:$0xf]
    %v123 = vld [vmem:[%s1 + $0x134] sm:$0xf]
    %v124 = vld [vmem:[%s1 + $0x138] sm:$0xf]
    %v125 = vld [vmem:[%s1 + $0x13c] sm:$0xf]
    %v126 = vld [vmem:[%s1 + $0x140] sm:$0xf]
    %v127 = vld [vmem:[%s1 + $0x144] sm:$0xf]
    %v128 = vld [vmem:[%s1 + $0x148] sm:$0xf]
    %v129 = vld [vmem:[%s1 + $0x14c] sm:$0xf]
    %v130 = vld [vmem:[%s1 + $0x150] sm:$0xf]
    %v131 = vld [vmem:[%s1 + $0x154] sm:$0xf]
    %v132 = vld [vmem:[%s1 + $0x158] sm:$0xf]
    %v133 = vld [vmem:[%s1 + $0x15c] sm:$0xf]
    %v134 = vld [vmem:[%s1 + $0x160] sm:$0xf]
    %v135 = vld [vmem:[%s1 + $0x164] sm:$0xf]
    %v136 = vld [vmem:[%s1 + $0x168] sm:$0xf]
    %v137 = vld [vmem:[%s1 + $0x16c] sm:$0xf]
    %v138 = vld [vmem:[%s1 + $0x170] sm:$0xf]
    %v139 = vld [vmem:[%s1 + $0x174] sm:$0xf]
    %v140 = vld [vmem:[%s1 + $0x178] sm:$0xf]
    %v141 = vld [vmem:[%s1 + $0x17c] sm:$0xf]
    %v142 = vld [vmem:[%s2] sm:$0x1]
    %v144 = vperm.slane %v142, 0
    %v152 = vunpack.c.l.b16 %v40
    %v153 = vunpack.c.h.b16 %v40
    %v154 = vunpack.c.l.b16 %v41
    %v155 = vunpack.c.h.b16 %v41
    %v156 = vunpack.c.l.b16 %v42
    %v157 = vunpack.c.h.b16 %v42
    %v158 = vunpack.c.l.b16 %v43
    %v159 = vunpack.c.h.b16 %v43
    %v160 = vunpack.c.l.b16 %v44
    %v161 = vunpack.c.h.b16 %v44
    %v162 = vunpack.c.l.b16 %v45
    %v163 = vunpack.c.h.b16 %v45
    %v164 = vpack.c.b16 %v158, %v152
    %v165 = vpack.c.b16 %v159, %v153
    %v166 = vpack.c.b16 %v160, %v154
    %v167 = vpack.c.b16 %v161, %v155
    %v168 = vpack.c.b16 %v162, %v156
    %v169 = vpack.c.b16 %v163, %v157
    %v272 = vunpack.c.l.b16 %v46
    %v273 = vunpack.c.l.b16 %v47
    %v274 = vunpack.c.l.b16 %v48
    %v275 = vunpack.c.l.b16 %v49
    %v276 = vunpack.c.l.b16 %v50
    %v277 = vunpack.c.l.b16 %v51
    %v278 = vunpack.c.l.b16 %v52
    %v279 = vunpack.c.l.b16 %v53
    %v280 = vunpack.c.l.b16 %v54
    %v281 = vunpack.c.l.b16 %v55
    %v282 = vunpack.c.l.b16 %v56
    %v283 = vunpack.c.l.b16 %v57
    %v284 = vunpack.c.l.b16 %v58
    %v285 = vunpack.c.l.b16 %v59
    %v286 = vunpack.c.l.b16 %v60
    %v287 = vunpack.c.l.b16 %v61
    %v288 = vunpack.c.l.b16 %v62
    %v289 = vunpack.c.l.b16 %v63
    %v290 = vunpack.c.l.b16 %v64
    %v291 = vunpack.c.l.b16 %v65
    %v292 = vunpack.c.l.b16 %v66
    %v293 = vunpack.c.l.b16 %v67
    %v294 = vunpack.c.l.b16 %v68
    %v295 = vunpack.c.l.b16 %v69
    %v296 = vunpack.c.l.b16 %v70
    %v297 = vunpack.c.l.b16 %v71
    %v298 = vunpack.c.l.b16 %v72
    %v299 = vunpack.c.l.b16 %v73
    %v300 = vunpack.c.l.b16 %v74
    %v301 = vunpack.c.l.b16 %v75
    %v302 = vunpack.c.l.b16 %v76
    %v303 = vunpack.c.l.b16 %v77
    %v304 = vunpack.c.l.b16 %v78
    %v305 = vunpack.c.l.b16 %v79
    %v306 = vunpack.c.l.b16 %v80
    %v307 = vunpack.c.l.b16 %v81
    %v308 = vunpack.c.l.b16 %v82
    %v309 = vunpack.c.l.b16 %v83
    %v310 = vunpack.c.l.b16 %v84
    %v311 = vunpack.c.l.b16 %v85
    %v312 = vunpack.c.l.b16 %v86
    %v313 = vunpack.c.l.b16 %v87
    %v314 = vunpack.c.l.b16 %v88
    %v315 = vunpack.c.l.b16 %v89
    %v316 = vunpack.c.l.b16 %v90
    %v317 = vunpack.c.l.b16 %v91
    %v318 = vunpack.c.l.b16 %v92
    %v319 = vunpack.c.l.b16 %v93
    %v320 = vunpack.c.l.b16 %v94
    %v321 = vunpack.c.l.b16 %v95
    %v322 = vunpack.c.l.b16 %v96
    %v323 = vunpack.c.l.b16 %v97
    %v324 = vunpack.c.l.b16 %v98
    %v325 = vunpack.c.l.b16 %v99
    %v326 = vunpack.c.l.b16 %v100
    %v327 = vunpack.c.l.b16 %v101
    %v328 = vunpack.c.l.b16 %v102
    %v329 = vunpack.c.l.b16 %v103
    %v330 = vunpack.c.l.b16 %v104
    %v331 = vunpack.c.l.b16 %v105
    %v332 = vunpack.c.l.b16 %v106
    %v333 = vunpack.c.l.b16 %v107
    %v334 = vunpack.c.l.b16 %v108
    %v335 = vunpack.c.l.b16 %v109
    %v336 = vunpack.c.l.b16 %v110
    %v337 = vunpack.c.l.b16 %v111
    %v338 = vunpack.c.l.b16 %v112
    %v339 = vunpack.c.l.b16 %v113
    %v340 = vunpack.c.l.b16 %v114
    %v341 = vunpack.c.l.b16 %v115
    %v342 = vunpack.c.l.b16 %v116
    %v343 = vunpack.c.l.b16 %v117
    %v344 = vunpack.c.l.b16 %v118
    %v345 = vunpack.c.l.b16 %v119
    %v346 = vunpack.c.l.b16 %v120
    %v347 = vunpack.c.l.b16 %v121
    %v348 = vunpack.c.l.b16 %v122
    %v349 = vunpack.c.l.b16 %v123
    %v350 = vunpack.c.l.b16 %v124
    %v351 = vunpack.c.l.b16 %v125
    %v352 = vunpack.c.l.b16 %v126
    %v353 = vunpack.c.l.b16 %v127
    %v354 = vunpack.c.l.b16 %v128
    %v355 = vunpack.c.l.b16 %v129
    %v356 = vunpack.c.l.b16 %v130
    %v357 = vunpack.c.l.b16 %v131
    %v358 = vunpack.c.l.b16 %v132
    %v359 = vunpack.c.l.b16 %v133
    %v360 = vunpack.c.l.b16 %v134
    %v361 = vunpack.c.l.b16 %v135
    %v362 = vunpack.c.l.b16 %v136
    %v363 = vunpack.c.l.b16 %v137
    %v364 = vunpack.c.l.b16 %v138
    %v365 = vunpack.c.l.b16 %v139
    %v366 = vunpack.c.l.b16 %v140
    %v367 = vunpack.c.l.b16 %v141
    %v368 = vpack.c.b16 %v273, %v272
    %v369 = vpack.c.b16 %v275, %v274
    %v370 = vpack.c.b16 %v277, %v276
    %v371 = vpack.c.b16 %v279, %v278
    %v372 = vpack.c.b16 %v281, %v280
    %v373 = vpack.c.b16 %v283, %v282
    %v374 = vpack.c.b16 %v285, %v284
    %v375 = vpack.c.b16 %v287, %v286
    %v376 = vpack.c.b16 %v289, %v288
    %v377 = vpack.c.b16 %v291, %v290
    %v378 = vpack.c.b16 %v293, %v292
    %v379 = vpack.c.b16 %v295, %v294
    %v380 = vpack.c.b16 %v297, %v296
    %v381 = vpack.c.b16 %v299, %v298
    %v382 = vpack.c.b16 %v301, %v300
    %v383 = vpack.c.b16 %v303, %v302
    %v384 = vpack.c.b16 %v305, %v304
    %v385 = vpack.c.b16 %v307, %v306
    %v386 = vpack.c.b16 %v309, %v308
    %v387 = vpack.c.b16 %v311, %v310
    %v388 = vpack.c.b16 %v313, %v312
    %v389 = vpack.c.b16 %v315, %v314
    %v390 = vpack.c.b16 %v317, %v316
    %v391 = vpack.c.b16 %v319, %v318
    %v392 = vpack.c.b16 %v321, %v320
    %v393 = vpack.c.b16 %v323, %v322
    %v394 = vpack.c.b16 %v325, %v324
    %v395 = vpack.c.b16 %v327, %v326
    %v396 = vpack.c.b16 %v329, %v328
    %v397 = vpack.c.b16 %v331, %v330
    %v398 = vpack.c.b16 %v333, %v332
    %v399 = vpack.c.b16 %v335, %v334
    %v400 = vpack.c.b16 %v337, %v336
    %v401 = vpack.c.b16 %v339, %v338
    %v402 = vpack.c.b16 %v341, %v340
    %v403 = vpack.c.b16 %v343, %v342
    %v404 = vpack.c.b16 %v345, %v344
    %v405 = vpack.c.b16 %v347, %v346
    %v406 = vpack.c.b16 %v349, %v348
    %v407 = vpack.c.b16 %v351, %v350
    %v408 = vpack.c.b16 %v353, %v352
    %v409 = vpack.c.b16 %v355, %v354
    %v410 = vpack.c.b16 %v357, %v356
    %v411 = vpack.c.b16 %v359, %v358
    %v412 = vpack.c.b16 %v361, %v360
    %v413 = vpack.c.b16 %v363, %v362
    %v414 = vpack.c.b16 %v365, %v364
    %v415 = vpack.c.b16 %v367, %v366
    %464 = vmatpush.bf16.msra.mxu0 %v375
    %465 = vmatpush.bf16.msra.mxu0 %v374
    %466 = vmatpush.bf16.msra.mxu0 %v373
    %467 = vmatpush.bf16.msra.mxu0 %v372
    %468 = vmatpush.bf16.msra.mxu0 %v371
    %469 = vmatpush.bf16.msra.mxu0 %v370
    %470 = vmatpush.bf16.msra.mxu0 %v369
    %471 = vmatpush.bf16.msra.mxu0 %v368
    %472 = vmatmul.bf16.gmra.mxu0 %v164
    %v473 = vpop.f32.mrf.mxu0
    %v474 = vadd.f32 %v144, %v473
    %v475 = vpop.f32.mrf.mxu0
    %v476 = vadd.f32 %v144, %v475
    %477 = vdwg.mxu0
    %478 = vmatpush.bf16.msra.mxu0 %v383
    %479 = vmatpush.bf16.msra.mxu0 %v382
    %480 = vmatpush.bf16.msra.mxu0 %v381
    %481 = vmatpush.bf16.msra.mxu0 %v380
    %482 = vmatpush.bf16.msra.mxu0 %v379
    %483 = vmatpush.bf16.msra.mxu0 %v378
    %484 = vmatpush.bf16.msra.mxu0 %v377
    %485 = vmatpush.bf16.msra.mxu0 %v376
    %486 = vmatmul.bf16.gmra.mxu0 %v165
    %v487 = vpop.f32.mrf.mxu0
    %v488 = vadd.f32 %v474, %v487
    %v489 = vpop.f32.mrf.mxu0
    %v490 = vadd.f32 %v476, %v489
    %491 = vdwg.mxu0
    %492 = vmatpush.bf16.msra.mxu0 %v391
    %493 = vmatpush.bf16.msra.mxu0 %v390
    %494 = vmatpush.bf16.msra.mxu0 %v389
    %495 = vmatpush.bf16.msra.mxu0 %v388
    %496 = vmatpush.bf16.msra.mxu0 %v387
    %497 = vmatpush.bf16.msra.mxu0 %v386
    %498 = vmatpush.bf16.msra.mxu0 %v385
    %499 = vmatpush.bf16.msra.mxu0 %v384
    %500 = vmatmul.bf16.gmra.mxu0 %v166
    %v501 = vpop.f32.mrf.mxu0
    %v502 = vadd.f32 %v488, %v501
    %v503 = vpop.f32.mrf.mxu0
    %v504 = vadd.f32 %v490, %v503
    %505 = vdwg.mxu0
    %506 = vmatpush.bf16.msra.mxu0 %v399
    %507 = vmatpush.bf16.msra.mxu0 %v398
    %508 = vmatpush.bf16.msra.mxu0 %v397
    %509 = vmatpush.bf16.msra.mxu0 %v396
    %510 = vmatpush.bf16.msra.mxu0 %v395
    %511 = vmatpush.bf16.msra.mxu0 %v394
    %512 = vmatpush.bf16.msra.mxu0 %v393
    %513 = vmatpush.bf16.msra.mxu0 %v392
    %514 = vmatmul.bf16.gmra.mxu0 %v167
    %v515 = vpop.f32.mrf.mxu0
    %v516 = vadd.f32 %v502, %v515
    %v517 = vpop.f32.mrf.mxu0
    %v518 = vadd.f32 %v504, %v517
    %519 = vdwg.mxu0
    %520 = vmatpush.bf16.msra.mxu0 %v407
    %521 = vmatpush.bf16.msra.mxu0 %v406
    %522 = vmatpush.bf16.msra.mxu0 %v405
    %523 = vmatpush.bf16.msra.mxu0 %v404
    %524 = vmatpush.bf16.msra.mxu0 %v403
    %525 = vmatpush.bf16.msra.mxu0 %v402
    %526 = vmatpush.bf16.msra.mxu0 %v401
    %527 = vmatpush.bf16.msra.mxu0 %v400
    %528 = vmatmul.bf16.gmra.mxu0 %v168
    %v529 = vpop.f32.mrf.mxu0
    %v530 = vadd.f32 %v516, %v529
    %v531 = vpop.f32.mrf.mxu0
    %v532 = vadd.f32 %v518, %v531
    %533 = vdwg.mxu0
    %534 = vmatpush.bf16.msra.mxu0 %v415
    %535 = vmatpush.bf16.msra.mxu0 %v414
    %536 = vmatpush.bf16.msra.mxu0 %v413
    %537 = vmatpush.bf16.msra.mxu0 %v412
    %538 = vmatpush.bf16.msra.mxu0 %v411
    %539 = vmatpush.bf16.msra.mxu0 %v410
    %540 = vmatpush.bf16.msra.mxu0 %v409
    %541 = vmatpush.bf16.msra.mxu0 %v408
    %542 = vmatmul.bf16.gmra.mxu0 %v169
    %v543 = vpop.f32.mrf.mxu0
    %v544 = vadd.f32 %v530, %v543
    %v545 = vpop.f32.mrf.mxu0
    %v546 = vadd.f32 %v532, %v545
    %547 = vdwg.mxu0
    %v548 = vpack.c.bf16 %v546, %v544
    %v549 = vld [vmem:[%s3] sm:$0xff]
    %v550 = vld [vmem:[%s3 + $0x8] sm:$0xff]
    %v551 = vld [vmem:[%s3 + $0x10] sm:$0xff]
    %v552 = vld [vmem:[%s3 + $0x18] sm:$0xff]
    %v553 = vld [vmem:[%s3 + $0x20] sm:$0xff]
    %v554 = vld [vmem:[%s3 + $0x28] sm:$0xff]
    %v555 = vld [vmem:[%s3 + $0x30] sm:$0xff]
    %v556 = vld [vmem:[%s3 + $0x38] sm:$0xff]
    %v557 = vld [vmem:[%s3 + $0x40] sm:$0xff]
    %v558 = vld [vmem:[%s3 + $0x48] sm:$0xff]
    %v559 = vld [vmem:[%s3 + $0x50] sm:$0xff]
    %v560 = vld [vmem:[%s3 + $0x58] sm:$0xff]
    %v561 = vld [vmem:[%s3 + $0x60] sm:$0xff]
    %v562 = vld [vmem:[%s3 + $0x68] sm:$0xff]
    %v563 = vld [vmem:[%s3 + $0x70] sm:$0xff]
    %v564 = vld [vmem:[%s3 + $0x78] sm:$0xff]
    %v565 = vld [vmem:[%s5] sm:$0x3]
    %v567 = vperm.slane %v565, 0
    %v568 = vperm.slane %v565, 1
    %v587 = vunpack.c.l.b16 %v549
    %v588 = vunpack.c.h.b16 %v549
    %v589 = vunpack.c.l.b16 %v550
    %v590 = vunpack.c.h.b16 %v550
    %v591 = vunpack.c.l.b16 %v551
    %v592 = vunpack.c.h.b16 %v551
    %v593 = vunpack.c.l.b16 %v552
    %v594 = vunpack.c.h.b16 %v552
    %v595 = vunpack.c.l.b16 %v553
    %v596 = vunpack.c.h.b16 %v553
    %v597 = vunpack.c.l.b16 %v554
    %v598 = vunpack.c.h.b16 %v554
    %v599 = vunpack.c.l.b16 %v555
    %v600 = vunpack.c.h.b16 %v555
    %v601 = vunpack.c.l.b16 %v556
    %v602 = vunpack.c.h.b16 %v556
    %v603 = vunpack.c.l.b16 %v557
    %v604 = vunpack.c.h.b16 %v557
    %v605 = vunpack.c.l.b16 %v558
    %v606 = vunpack.c.h.b16 %v558
    %v607 = vunpack.c.l.b16 %v559
    %v608 = vunpack.c.h.b16 %v559
    %v609 = vunpack.c.l.b16 %v560
    %v610 = vunpack.c.h.b16 %v560
    %v611 = vunpack.c.l.b16 %v561
    %v612 = vunpack.c.h.b16 %v561
    %v613 = vunpack.c.l.b16 %v562
    %v614 = vunpack.c.h.b16 %v562
    %v615 = vunpack.c.l.b16 %v563
    %v616 = vunpack.c.h.b16 %v563
    %v617 = vunpack.c.l.b16 %v564
    %v618 = vunpack.c.h.b16 %v564
    %v619 = vpack.c.b16 %v589, %v587
    %v620 = vpack.c.b16 %v590, %v588
    %v621 = vpack.c.b16 %v593, %v591
    %v622 = vpack.c.b16 %v594, %v592
    %v623 = vpack.c.b16 %v597, %v595
    %v624 = vpack.c.b16 %v598, %v596
    %v625 = vpack.c.b16 %v601, %v599
    %v626 = vpack.c.b16 %v602, %v600
    %v627 = vpack.c.b16 %v605, %v603
    %v628 = vpack.c.b16 %v606, %v604
    %v629 = vpack.c.b16 %v609, %v607
    %v630 = vpack.c.b16 %v610, %v608
    %v631 = vpack.c.b16 %v613, %v611
    %v632 = vpack.c.b16 %v614, %v612
    %v633 = vpack.c.b16 %v617, %v615
    %v634 = vpack.c.b16 %v618, %v616
    %651 = vmatpush.bf16.msra.mxu0 %v633
    %652 = vmatpush.bf16.msra.mxu0 %v631
    %653 = vmatpush.bf16.msra.mxu0 %v629
    %654 = vmatpush.bf16.msra.mxu0 %v627
    %655 = vmatpush.bf16.msra.mxu0 %v625
    %656 = vmatpush.bf16.msra.mxu0 %v623
    %657 = vmatpush.bf16.msra.mxu0 %v621
    %658 = vmatpush.bf16.msra.mxu0 %v619
    %659 = vmatmul.bf16.gmra.mxu0 %v548
    %v660 = vpop.f32.mrf.mxu0
    %v661 = vadd.f32 %v567, %v660
    %v662 = vpop.f32.mrf.mxu0
    %v663 = vadd.f32 %v567, %v662
    %664 = vdwg.mxu0
    %665 = vmatpush.bf16.msra.mxu0 %v634
    %666 = vmatpush.bf16.msra.mxu0 %v632
    %667 = vmatpush.bf16.msra.mxu0 %v630
    %668 = vmatpush.bf16.msra.mxu0 %v628
    %669 = vmatpush.bf16.msra.mxu0 %v626
    %670 = vmatpush.bf16.msra.mxu0 %v624
    %671 = vmatpush.bf16.msra.mxu0 %v622
    %672 = vmatpush.bf16.msra.mxu0 %v620
    %673 = vmatmul.bf16.gmra.mxu0 %v548
    %v674 = vpop.f32.mrf.mxu0
    %v675 = vadd.f32 %v568, %v674
    %v676 = vpop.f32.mrf.mxu0
    %v677 = vadd.f32 %v568, %v676
    %678 = vdwg.mxu0
    %v679 = vld [vmem:[%s4] sm:$0xff]
    %v680 = vld [vmem:[%s4 + $0x8] sm:$0xff]
    %v681 = vld [vmem:[%s4 + $0x10] sm:$0xff]
    %v682 = vld [vmem:[%s4 + $0x18] sm:$0xff]
    %v683 = vld [vmem:[%s4 + $0x20] sm:$0xff]
    %v684 = vld [vmem:[%s4 + $0x28] sm:$0xff]
    %v685 = vld [vmem:[%s4 + $0x30] sm:$0xff]
    %v686 = vld [vmem:[%s4 + $0x38] sm:$0xff]
    %v687 = vld [vmem:[%s6] sm:$0xff]
    %v688 = vld [vmem:[%s6 + $0x8] sm:$0xff]
    %v689 = vld [vmem:[%s6 + $0x10] sm:$0xff]
    %v690 = vld [vmem:[%s6 + $0x18] sm:$0xff]
    %v691 = vld [vmem:[%s6 + $0x20] sm:$0xff]
    %v692 = vld [vmem:[%s6 + $0x28] sm:$0xff]
    %v693 = vld [vmem:[%s6 + $0x30] sm:$0xff]
    %v694 = vld [vmem:[%s6 + $0x38] sm:$0xff]
    %v695 = vld [vmem:[%s7] sm:$0xff]
    %v696 = vld [vmem:[%s7 + $0x8] sm:$0xff]
    %v697 = vld [vmem:[%s7 + $0x10] sm:$0xff]
    %v698 = vld [vmem:[%s7 + $0x18] sm:$0xff]
    %v699 = vld [vmem:[%s7 + $0x20] sm:$0xff]
    %v700 = vld [vmem:[%s7 + $0x28] sm:$0xff]
    %v701 = vld [vmem:[%s7 + $0x30] sm:$0xff]
    %v702 = vld [vmem:[%s7 + $0x38] sm:$0xff]
    %v703 = vld [vmem:[%s8] sm:$0x3]
    %v712 = vunpack.c.l.b16 %v679
    %v713 = vunpack.c.h.b16 %v679
    %v714 = vunpack.c.l.b16 %v680
    %v715 = vunpack.c.h.b16 %v680
    %v716 = vunpack.c.l.b16 %v681
    %v717 = vunpack.c.h.b16 %v681
    %v718 = vunpack.c.l.b16 %v682
    %v719 = vunpack.c.h.b16 %v682
    %v720 = vunpack.c.l.b16 %v683
    %v721 = vunpack.c.h.b16 %v683
    %v722 = vunpack.c.l.b16 %v684
    %v723 = vunpack.c.h.b16 %v684
    %v724 = vunpack.c.l.b16 %v685
    %v725 = vunpack.c.h.b16 %v685
    %v726 = vunpack.c.l.b16 %v686
    %v727 = vunpack.c.h.b16 %v686
    %v728 = vpack.c.b16 %v714, %v712
    %v729 = vpack.c.b16 %v715, %v713
    %v730 = vpack.c.b16 %v718, %v716
    %v731 = vpack.c.b16 %v719, %v717
    %v732 = vpack.c.b16 %v722, %v720
    %v733 = vpack.c.b16 %v723, %v721
    %v734 = vpack.c.b16 %v726, %v724
    %v735 = vpack.c.b16 %v727, %v725
    %vm744 = vcmask 523264
    %v746 = vsel %vm744, 0, 0
    %748 = vmatpush.bf16.msra.mxu0 0
    %749 = vmatpush.bf16.msra.mxu0 0
    %750 = vmatpush.bf16.msra.mxu0 0
    %751 = vmatpush.bf16.msra.mxu0 0
    %752 = vmatpush.bf16.msra.mxu0 %v734
    %753 = vmatpush.bf16.msra.mxu0 %v732
    %754 = vmatpush.bf16.msra.mxu0 %v730
    %755 = vmatpush.bf16.msra.mxu0 %v728
    %756 = vmatmul.bf16.gmra.mxu0 %v746
    %v757 = vpop.f32.mrf.mxu0
    %v758 = vadd.f32 0.0, %v757
    %v759 = vpop.f32.mrf.mxu0
    %760 = vdwg.mxu0
    %761 = vmatpush.bf16.msra.mxu0 0
    %762 = vmatpush.bf16.msra.mxu0 0
    %763 = vmatpush.bf16.msra.mxu0 0
    %764 = vmatpush.bf16.msra.mxu0 0
    %765 = vmatpush.bf16.msra.mxu0 %v735
    %766 = vmatpush.bf16.msra.mxu0 %v733
    %767 = vmatpush.bf16.msra.mxu0 %v731
    %768 = vmatpush.bf16.msra.mxu0 %v729
    %769 = vmatmul.bf16.gmra.mxu0 %v746
    %v770 = vpop.f32.mrf.mxu0
    %v771 = vadd.f32 0.0, %v770
    %v772 = vpop.f32.mrf.mxu0
    %773 = vdwg.mxu0
    %v774 = vadd.f32 %v661, %v758
    %v775 = vadd.f32 %v675, %v771
    %v776 = vxor.u32 %v774, 2147483648
    %v777 = vxor.u32 %v775, 2147483648
    %v778 = vmul.f32 %v776, 1.442695
    %v779 = vpow.pop %v778
    %v780 = vmul.f32 %v777, 1.442695
    %v781 = vpow.pop %v780
    %v782 = vadd.f32 %v779, 1.0
    %v783 = vadd.f32 %v781, 1.0
    %v784 = vrcp.pop %v782
    %v785 = vmul.f32 %v782, %v784
    %v786 = vsub.f32 1.0, %v785
    %v787 = vmul.f32 %v784, %v786
    %v788 = vadd.f32 %v784, %v787
    %vm789 = vweird.f32 %v782
    %vm790 = vweird.f32 %v784
    %vm791 = vmor %vm789, %vm790
    %v792 = vsel %vm791, %v784, %v788
    %v793 = vand.u32 2147483647, %v782
    %vm794 = vcmp.eq.f32.partialorder %v793, 8.507059e+37
    %v795 = vand.u32 %v782, 2147483648
    %v796 = vor.u32 1.1754944e-38, %v795
    %v797 = vsel %vm794, %v796, %v792
    %v798 = vmul.f32 1.0, %v797
    %v799 = vrcp.pop %v783
    %v800 = vmul.f32 %v783, %v799
    %v801 = vsub.f32 1.0, %v800
    %v802 = vmul.f32 %v799, %v801
    %v803 = vadd.f32 %v799, %v802
    %vm804 = vweird.f32 %v783
    %vm805 = vweird.f32 %v799
    %vm806 = vmor %vm804, %vm805
    %v807 = vsel %vm806, %v799, %v803
    %v808 = vand.u32 2147483647, %v783
    %vm809 = vcmp.eq.f32.partialorder %v808, 8.507059e+37
    %v810 = vand.u32 %v783, 2147483648
    %v811 = vor.u32 1.1754944e-38, %v810
    %v812 = vsel %vm809, %v811, %v807
    %v813 = vmul.f32 1.0, %v812
    %v814 = vtanh.pop %v775
    %v815 = vmul.f32 %v798, 0.0
    %817 = vrot.lane.b32.xlu0 %v814, 64
    %v818 = vpop.permute.xlu0 %817
    %v820 = vmul.f32 %v798, %v818
    %822 = vrot.lane.b32.xlu0 %v820, 64
    %v823 = vpop.permute.xlu0 %822
    %v825 = vadd.f32 %v815, %v823
    %v826 = vtanh.pop %v825
    %828 = vrot.lane.b32.xlu0 %v826, 64
    %v829 = vpop.permute.xlu0 %828
    %v831 = vmul.f32 %v813, %v829
    %v832 = vpack.c.bf16 %v831, %v831
    %v834 = vsel %vm744, %v832, 0
    %836 = vmatpush.bf16.msra.mxu0 0
    %837 = vmatpush.bf16.msra.mxu0 0
    %838 = vmatpush.bf16.msra.mxu0 0
    %839 = vmatpush.bf16.msra.mxu0 0
    %840 = vmatpush.bf16.msra.mxu0 %v734
    %841 = vmatpush.bf16.msra.mxu0 %v732
    %842 = vmatpush.bf16.msra.mxu0 %v730
    %843 = vmatpush.bf16.msra.mxu0 %v728
    %844 = vmatmul.bf16.gmra.mxu0 %v834
    %v845 = vpop.f32.mrf.mxu0
    %v846 = vadd.f32 0.0, %v845
    %v847 = vpop.f32.mrf.mxu0
    %848 = vdwg.mxu0
    %849 = vmatpush.bf16.msra.mxu0 0
    %850 = vmatpush.bf16.msra.mxu0 0
    %851 = vmatpush.bf16.msra.mxu0 0
    %852 = vmatpush.bf16.msra.mxu0 0
    %853 = vmatpush.bf16.msra.mxu0 %v735
    %854 = vmatpush.bf16.msra.mxu0 %v733
    %855 = vmatpush.bf16.msra.mxu0 %v731
    %856 = vmatpush.bf16.msra.mxu0 %v729
    %857 = vmatmul.bf16.gmra.mxu0 %v834
    %v858 = vpop.f32.mrf.mxu0
    %v859 = vadd.f32 0.0, %v858
    %v860 = vpop.f32.mrf.mxu0
    %861 = vdwg.mxu0
    %v864 = vrot.slane %v846, 6
    %v865 = vrot.slane %v859, 6
    %v868 = vadd.f32 %v661, %v864
    %v869 = vadd.f32 %v675, %v865
    %v878 = vunpack.c.l.b16 %v695
    %v879 = vunpack.c.h.b16 %v695
    %v880 = vunpack.c.l.b16 %v696
    %v881 = vunpack.c.h.b16 %v696
    %v882 = vunpack.c.l.b16 %v697
    %v883 = vunpack.c.h.b16 %v697
    %v884 = vunpack.c.l.b16 %v698
    %v885 = vunpack.c.h.b16 %v698
    %v886 = vunpack.c.l.b16 %v699
    %v887 = vunpack.c.h.b16 %v699
    %v888 = vunpack.c.l.b16 %v700
    %v889 = vunpack.c.h.b16 %v700
    %v890 = vunpack.c.l.b16 %v701
    %v891 = vunpack.c.h.b16 %v701
    %v892 = vunpack.c.l.b16 %v702
    %v893 = vunpack.c.h.b16 %v702
    %v894 = vpack.c.b16 %v880, %v878
    %v895 = vpack.c.b16 %v881, %v879
    %v896 = vpack.c.b16 %v884, %v882
    %v897 = vpack.c.b16 %v885, %v883
    %v898 = vpack.c.b16 %v888, %v886
    %v899 = vpack.c.b16 %v889, %v887
    %v900 = vpack.c.b16 %v892, %v890
    %v901 = vpack.c.b16 %v893, %v891
    %910 = vmatpush.bf16.msra.mxu0 0
    %911 = vmatpush.bf16.msra.mxu0 0
    %912 = vmatpush.bf16.msra.mxu0 0
    %913 = vmatpush.bf16.msra.mxu0 0
    %914 = vmatpush.bf16.msra.mxu0 %v900
    %915 = vmatpush.bf16.msra.mxu0 %v898
    %916 = vmatpush.bf16.msra.mxu0 %v896
    %917 = vmatpush.bf16.msra.mxu0 %v894
    %918 = vmatmul.bf16.gmra.mxu0 %v746
    %v919 = vpop.f32.mrf.mxu0
    %v920 = vadd.f32 0.0, %v919
    %v921 = vpop.f32.mrf.mxu0
    %922 = vdwg.mxu0
    %923 = vmatpush.bf16.msra.mxu0 0
    %924 = vmatpush.bf16.msra.mxu0 0
    %925 = vmatpush.bf16.msra.mxu0 0
    %926 = vmatpush.bf16.msra.mxu0 0
    %927 = vmatpush.bf16.msra.mxu0 %v901
    %928 = vmatpush.bf16.msra.mxu0 %v899
    %929 = vmatpush.bf16.msra.mxu0 %v897
    %930 = vmatpush.bf16.msra.mxu0 %v895
    %931 = vmatmul.bf16.gmra.mxu0 %v746
    %v932 = vpop.f32.mrf.mxu0
    %v933 = vadd.f32 0.0, %v932
    %v934 = vpop.f32.mrf.mxu0
    %935 = vdwg.mxu0
    %v944 = vunpack.c.l.b16 %v687
    %v945 = vunpack.c.h.b16 %v687
    %v946 = vunpack.c.l.b16 %v688
    %v947 = vunpack.c.h.b16 %v688
    %v948 = vunpack.c.l.b16 %v689
    %v949 = vunpack.c.h.b16 %v689
    %v950 = vunpack.c.l.b16 %v690
    %v951 = vunpack.c.h.b16 %v690
    %v952 = vunpack.c.l.b16 %v691
    %v953 = vunpack.c.h.b16 %v691
    %v954 = vunpack.c.l.b16 %v692
    %v955 = vunpack.c.h.b16 %v692
    %v956 = vunpack.c.l.b16 %v693
    %v957 = vunpack.c.h.b16 %v693
    %v958 = vunpack.c.l.b16 %v694
    %v959 = vunpack.c.h.b16 %v694
    %v960 = vpack.c.b16 %v946, %v944
    %v961 = vpack.c.b16 %v947, %v945
    %v962 = vpack.c.b16 %v950, %v948
    %v963 = vpack.c.b16 %v951, %v949
    %v964 = vpack.c.b16 %v954, %v952
    %v965 = vpack.c.b16 %v955, %v953
    %v966 = vpack.c.b16 %v958, %v956
    %v967 = vpack.c.b16 %v959, %v957
    %976 = vmatpush.bf16.msra.mxu0 0
    %977 = vmatpush.bf16.msra.mxu0 0
    %978 = vmatpush.bf16.msra.mxu0 0
    %979 = vmatpush.bf16.msra.mxu0 0
    %980 = vmatpush.bf16.msra.mxu0 %v966
    %981 = vmatpush.bf16.msra.mxu0 %v964
    %982 = vmatpush.bf16.msra.mxu0 %v962
    %983 = vmatpush.bf16.msra.mxu0 %v960
    %984 = vmatmul.bf16.gmra.mxu0 %v834
    %v985 = vpop.f32.mrf.mxu0
    %v986 = vadd.f32 %v920, %v985
    %v987 = vpop.f32.mrf.mxu0
    %988 = vdwg.mxu0
    %989 = vmatpush.bf16.msra.mxu0 0
    %990 = vmatpush.bf16.msra.mxu0 0
    %991 = vmatpush.bf16.msra.mxu0 0
    %992 = vmatpush.bf16.msra.mxu0 0
    %993 = vmatpush.bf16.msra.mxu0 %v967
    %994 = vmatpush.bf16.msra.mxu0 %v965
    %995 = vmatpush.bf16.msra.mxu0 %v963
    %996 = vmatpush.bf16.msra.mxu0 %v961
    %997 = vmatmul.bf16.gmra.mxu0 %v834
    %v998 = vpop.f32.mrf.mxu0
    %v999 = vadd.f32 %v933, %v998
    %v1000 = vpop.f32.mrf.mxu0
    %1001 = vdwg.mxu0
    %v1003 = vperm.slane %v703, 0
    %v1004 = vperm.slane %v703, 1
    %v1007 = vadd.f32 %v986, %v1003
    %v1008 = vadd.f32 %v999, %v1004
    %v1009 = vxor.u32 %v868, 2147483648
    %v1010 = vxor.u32 %v869, 2147483648
    %v1011 = vmul.f32 %v1009, 1.442695
    %v1012 = vpow.pop %v1011
    %v1013 = vmul.f32 %v1010, 1.442695
    %v1014 = vpow.pop %v1013
    %v1015 = vadd.f32 %v1012, 1.0
    %v1016 = vadd.f32 %v1014, 1.0
    %v1017 = vrcp.pop %v1015
    %v1018 = vmul.f32 %v1015, %v1017
    %v1019 = vsub.f32 1.0, %v1018
    %v1020 = vmul.f32 %v1017, %v1019
    %v1021 = vadd.f32 %v1017, %v1020
    %vm1022 = vweird.f32 %v1015
    %vm1023 = vweird.f32 %v1017
    %vm1024 = vmor %vm1022, %vm1023
    %v1025 = vsel %vm1024, %v1017, %v1021
    %v1026 = vand.u32 2147483647, %v1015
    %vm1027 = vcmp.eq.f32.partialorder %v1026, 8.507059e+37
    %v1028 = vand.u32 %v1015, 2147483648
    %v1029 = vor.u32 1.1754944e-38, %v1028
    %v1030 = vsel %vm1027, %v1029, %v1025
    %v1031 = vmul.f32 1.0, %v1030
    %v1032 = vrcp.pop %v1016
    %v1033 = vmul.f32 %v1016, %v1032
    %v1034 = vsub.f32 1.0, %v1033
    %v1035 = vmul.f32 %v1032, %v1034
    %v1036 = vadd.f32 %v1032, %v1035
    %vm1037 = vweird.f32 %v1016
    %vm1038 = vweird.f32 %v1032
    %vm1039 = vmor %vm1037, %vm1038
    %v1040 = vsel %vm1039, %v1032, %v1036
    %v1041 = vand.u32 2147483647, %v1016
    %vm1042 = vcmp.eq.f32.partialorder %v1041, 8.507059e+37
    %v1043 = vand.u32 %v1016, 2147483648
    %v1044 = vor.u32 1.1754944e-38, %v1043
    %v1045 = vsel %vm1042, %v1044, %v1040
    %v1046 = vmul.f32 1.0, %v1045
    %v1047 = vtanh.pop %v869
    %v1049 = vrot.slane %v825, 6
    %v1051 = vmul.f32 %v1031, %v1049
    %1053 = vrot.lane.b32.xlu0 %v1047, 64
    %v1054 = vpop.permute.xlu0 %1053
    %v1056 = vmul.f32 %v1031, %v1054
    %1058 = vrot.lane.b32.xlu0 %v1056, 64
    %v1059 = vpop.permute.xlu0 %1058
    %v1061 = vadd.f32 %v1051, %v1059
    %v1062 = vtanh.pop %v1061
    %1064 = vrot.lane.b32.xlu0 %v1062, 64
    %v1065 = vpop.permute.xlu0 %1064
    %v1067 = vmul.f32 %v1046, %v1065
    %v1068 = vxor.u32 %v1007, 2147483648
    %v1069 = vxor.u32 %v1008, 2147483648
    %v1070 = vmul.f32 %v1068, 1.442695
    %v1071 = vpow.pop %v1070
    %v1072 = vmul.f32 %v1069, 1.442695
    %v1073 = vpow.pop %v1072
    %v1074 = vadd.f32 %v1071, 1.0
    %v1075 = vadd.f32 %v1073, 1.0
    %v1076 = vrcp.pop %v1074
    %v1077 = vmul.f32 %v1074, %v1076
    %v1078 = vsub.f32 1.0, %v1077
    %v1079 = vmul.f32 %v1076, %v1078
    %v1080 = vadd.f32 %v1076, %v1079
    %vm1081 = vweird.f32 %v1074
    %vm1082 = vweird.f32 %v1076
    %vm1083 = vmor %vm1081, %vm1082
    %v1084 = vsel %vm1083, %v1076, %v1080
    %v1085 = vand.u32 2147483647, %v1074
    %vm1086 = vcmp.eq.f32.partialorder %v1085, 8.507059e+37
    %v1087 = vand.u32 %v1074, 2147483648
    %v1088 = vor.u32 1.1754944e-38, %v1087
    %v1089 = vsel %vm1086, %v1088, %v1084
    %v1090 = vmul.f32 1.0, %v1089
    %v1091 = vrcp.pop %v1075
    %v1092 = vmul.f32 %v1075, %v1091
    %v1093 = vsub.f32 1.0, %v1092
    %v1094 = vmul.f32 %v1091, %v1093
    %v1095 = vadd.f32 %v1091, %v1094
    %vm1096 = vweird.f32 %v1075
    %vm1097 = vweird.f32 %v1091
    %vm1098 = vmor %vm1096, %vm1097
    %v1099 = vsel %vm1098, %v1091, %v1095
    %v1100 = vand.u32 2147483647, %v1075
    %vm1101 = vcmp.eq.f32.partialorder %v1100, 8.507059e+37
    %v1102 = vand.u32 %v1075, 2147483648
    %v1103 = vor.u32 1.1754944e-38, %v1102
    %v1104 = vsel %vm1101, %v1103, %v1099
    %v1105 = vmul.f32 1.0, %v1104
    %v1106 = vtanh.pop %v1008
    %v1107 = vmul.f32 %v1090, 0.0
    %1109 = vrot.lane.b32.xlu0 %v1106, 64
    %v1110 = vpop.permute.xlu0 %1109
    %v1112 = vmul.f32 %v1090, %v1110
    %1114 = vrot.lane.b32.xlu0 %v1112, 64
    %v1115 = vpop.permute.xlu0 %1114
    %v1117 = vadd.f32 %v1107, %v1115
    %v1118 = vtanh.pop %v1117
    %1120 = vrot.lane.b32.xlu0 %v1118, 64
    %v1121 = vpop.permute.xlu0 %1120
    %v1123 = vmul.f32 %v1105, %v1121
    %v1124 = vadd.f32 %v1123, 0.0
    %v1125 = vpack.c.bf16 %v1067, %v1067
    %v1126 = vpack.c.bf16 %v1123, %v1123
    %v1128 = vrot.slane %v1125, 1
    %v1130 = vsel %vm744, %v1128, 0
    %1132 = vmatpush.bf16.msra.mxu0 0
    %1133 = vmatpush.bf16.msra.mxu0 0
    %1134 = vmatpush.bf16.msra.mxu0 0
    %1135 = vmatpush.bf16.msra.mxu0 0
    %1136 = vmatpush.bf16.msra.mxu0 %v734
    %1137 = vmatpush.bf16.msra.mxu0 %v732
    %1138 = vmatpush.bf16.msra.mxu0 %v730
    %1139 = vmatpush.bf16.msra.mxu0 %v728
    %1140 = vmatmul.bf16.gmra.mxu0 %v1130
    %v1141 = vpop.f32.mrf.mxu0
    %v1142 = vadd.f32 0.0, %v1141
    %v1143 = vpop.f32.mrf.mxu0
    %1144 = vdwg.mxu0
    %1145 = vmatpush.bf16.msra.mxu0 0
    %1146 = vmatpush.bf16.msra.mxu0 0
    %1147 = vmatpush.bf16.msra.mxu0 0
    %1148 = vmatpush.bf16.msra.mxu0 0
    %1149 = vmatpush.bf16.msra.mxu0 %v735
    %1150 = vmatpush.bf16.msra.mxu0 %v733
    %1151 = vmatpush.bf16.msra.mxu0 %v731
    %1152 = vmatpush.bf16.msra.mxu0 %v729
    %1153 = vmatmul.bf16.gmra.mxu0 %v1130
    %v1154 = vpop.f32.mrf.mxu0
    %v1155 = vadd.f32 0.0, %v1154
    %v1156 = vpop.f32.mrf.mxu0
    %1157 = vdwg.mxu0
    %v1160 = vrot.slane %v1142, 4
    %v1161 = vrot.slane %v1155, 4
    %v1164 = vadd.f32 %v661, %v1160
    %v1165 = vadd.f32 %v675, %v1161
    %v1167 = vsel %vm744, %v1126, 0
    %1169 = vmatpush.bf16.msra.mxu0 0
    %1170 = vmatpush.bf16.msra.mxu0 0
    %1171 = vmatpush.bf16.msra.mxu0 0
    %1172 = vmatpush.bf16.msra.mxu0 0
    %1173 = vmatpush.bf16.msra.mxu0 %v900
    %1174 = vmatpush.bf16.msra.mxu0 %v898
    %1175 = vmatpush.bf16.msra.mxu0 %v896
    %1176 = vmatpush.bf16.msra.mxu0 %v894
    %1177 = vmatmul.bf16.gmra.mxu0 %v1167
    %v1178 = vpop.f32.mrf.mxu0
    %v1179 = vadd.f32 0.0, %v1178
    %v1180 = vpop.f32.mrf.mxu0
    %1181 = vdwg.mxu0
    %1182 = vmatpush.bf16.msra.mxu0 0
    %1183 = vmatpush.bf16.msra.mxu0 0
    %1184 = vmatpush.bf16.msra.mxu0 0
    %1185 = vmatpush.bf16.msra.mxu0 0
    %1186 = vmatpush.bf16.msra.mxu0 %v901
    %1187 = vmatpush.bf16.msra.mxu0 %v899
    %1188 = vmatpush.bf16.msra.mxu0 %v897
    %1189 = vmatpush.bf16.msra.mxu0 %v895
    %1190 = vmatmul.bf16.gmra.mxu0 %v1167
    %v1191 = vpop.f32.mrf.mxu0
    %v1192 = vadd.f32 0.0, %v1191
    %v1193 = vpop.f32.mrf.mxu0
    %1194 = vdwg.mxu0
    %1195 = vmatpush.bf16.msra.mxu0 0
    %1196 = vmatpush.bf16.msra.mxu0 0
    %1197 = vmatpush.bf16.msra.mxu0 0
    %1198 = vmatpush.bf16.msra.mxu0 0
    %1199 = vmatpush.bf16.msra.mxu0 %v966
    %1200 = vmatpush.bf16.msra.mxu0 %v964
    %1201 = vmatpush.bf16.msra.mxu0 %v962
    %1202 = vmatpush.bf16.msra.mxu0 %v960
    %1203 = vmatmul.bf16.gmra.mxu0 %v1130
    %v1204 = vpop.f32.mrf.mxu0
    %v1205 = vadd.f32 %v1179, %v1204
    %v1206 = vpop.f32.mrf.mxu0
    %1207 = vdwg.mxu0
    %1208 = vmatpush.bf16.msra.mxu0 0
    %1209 = vmatpush.bf16.msra.mxu0 0
    %1210 = vmatpush.bf16.msra.mxu0 0
    %1211 = vmatpush.bf16.msra.mxu0 0
    %1212 = vmatpush.bf16.msra.mxu0 %v967
    %1213 = vmatpush.bf16.msra.mxu0 %v965
    %1214 = vmatpush.bf16.msra.mxu0 %v963
    %1215 = vmatpush.bf16.msra.mxu0 %v961
    %1216 = vmatmul.bf16.gmra.mxu0 %v1130
    %v1217 = vpop.f32.mrf.mxu0
    %v1218 = vadd.f32 %v1192, %v1217
    %v1219 = vpop.f32.mrf.mxu0
    %1220 = vdwg.mxu0
    %v1221 = vadd.f32 %v1205, %v1003
    %v1222 = vadd.f32 %v1218, %v1004
    %v1223 = vxor.u32 %v1164, 2147483648
    %v1224 = vxor.u32 %v1165, 2147483648
    %v1225 = vmul.f32 %v1223, 1.442695
    %v1226 = vpow.pop %v1225
    %v1227 = vmul.f32 %v1224, 1.442695
    %v1228 = vpow.pop %v1227
    %v1229 = vadd.f32 %v1226, 1.0
    %v1230 = vadd.f32 %v1228, 1.0
    %v1231 = vrcp.pop %v1229
    %v1232 = vmul.f32 %v1229, %v1231
    %v1233 = vsub.f32 1.0, %v1232
    %v1234 = vmul.f32 %v1231, %v1233
    %v1235 = vadd.f32 %v1231, %v1234
    %vm1236 = vweird.f32 %v1229
    %vm1237 = vweird.f32 %v1231
    %vm1238 = vmor %vm1236, %vm1237
    %v1239 = vsel %vm1238, %v1231, %v1235
    %v1240 = vand.u32 2147483647, %v1229
    %vm1241 = vcmp.eq.f32.partialorder %v1240, 8.507059e+37
    %v1242 = vand.u32 %v1229, 2147483648
    %v1243 = vor.u32 1.1754944e-38, %v1242
    %v1244 = vsel %vm1241, %v1243, %v1239
    %v1245 = vmul.f32 1.0, %v1244
    %v1246 = vrcp.pop %v1230
    %v1247 = vmul.f32 %v1230, %v1246
    %v1248 = vsub.f32 1.0, %v1247
    %v1249 = vmul.f32 %v1246, %v1248
    %v1250 = vadd.f32 %v1246, %v1249
    %vm1251 = vweird.f32 %v1230
    %vm1252 = vweird.f32 %v1246
    %vm1253 = vmor %vm1251, %vm1252
    %v1254 = vsel %vm1253, %v1246, %v1250
    %v1255 = vand.u32 2147483647, %v1230
    %vm1256 = vcmp.eq.f32.partialorder %v1255, 8.507059e+37
    %v1257 = vand.u32 %v1230, 2147483648
    %v1258 = vor.u32 1.1754944e-38, %v1257
    %v1259 = vsel %vm1256, %v1258, %v1254
    %v1260 = vmul.f32 1.0, %v1259
    %v1261 = vtanh.pop %v1165
    %v1263 = vrot.slane %v1061, 6
    %v1265 = vmul.f32 %v1245, %v1263
    %1267 = vrot.lane.b32.xlu0 %v1261, 64
    %v1268 = vpop.permute.xlu0 %1267
    %v1270 = vmul.f32 %v1245, %v1268
    %1272 = vrot.lane.b32.xlu0 %v1270, 64
    %v1273 = vpop.permute.xlu0 %1272
    %v1275 = vadd.f32 %v1265, %v1273
    %v1276 = vtanh.pop %v1275
    %1278 = vrot.lane.b32.xlu0 %v1276, 64
    %v1279 = vpop.permute.xlu0 %1278
    %v1281 = vmul.f32 %v1260, %v1279
    %v1282 = vxor.u32 %v1221, 2147483648
    %v1283 = vxor.u32 %v1222, 2147483648
    %v1284 = vmul.f32 %v1282, 1.442695
    %v1285 = vpow.pop %v1284
    %v1286 = vmul.f32 %v1283, 1.442695
    %v1287 = vpow.pop %v1286
    %v1288 = vadd.f32 %v1285, 1.0
    %v1289 = vadd.f32 %v1287, 1.0
    %v1290 = vrcp.pop %v1288
    %v1291 = vmul.f32 %v1288, %v1290
    %v1292 = vsub.f32 1.0, %v1291
    %v1293 = vmul.f32 %v1290, %v1292
    %v1294 = vadd.f32 %v1290, %v1293
    %vm1295 = vweird.f32 %v1288
    %vm1296 = vweird.f32 %v1290
    %vm1297 = vmor %vm1295, %vm1296
    %v1298 = vsel %vm1297, %v1290, %v1294
    %v1299 = vand.u32 2147483647, %v1288
    %vm1300 = vcmp.eq.f32.partialorder %v1299, 8.507059e+37
    %v1301 = vand.u32 %v1288, 2147483648
    %v1302 = vor.u32 1.1754944e-38, %v1301
    %v1303 = vsel %vm1300, %v1302, %v1298
    %v1304 = vmul.f32 1.0, %v1303
    %v1305 = vrcp.pop %v1289
    %v1306 = vmul.f32 %v1289, %v1305
    %v1307 = vsub.f32 1.0, %v1306
    %v1308 = vmul.f32 %v1305, %v1307
    %v1309 = vadd.f32 %v1305, %v1308
    %vm1310 = vweird.f32 %v1289
    %vm1311 = vweird.f32 %v1305
    %vm1312 = vmor %vm1310, %vm1311
    %v1313 = vsel %vm1312, %v1305, %v1309
    %v1314 = vand.u32 2147483647, %v1289
    %vm1315 = vcmp.eq.f32.partialorder %v1314, 8.507059e+37
    %v1316 = vand.u32 %v1289, 2147483648
    %v1317 = vor.u32 1.1754944e-38, %v1316
    %v1318 = vsel %vm1315, %v1317, %v1313
    %v1319 = vmul.f32 1.0, %v1318
    %v1320 = vtanh.pop %v1222
    %v1321 = vmul.f32 %v1304, %v1117
    %1323 = vrot.lane.b32.xlu0 %v1320, 64
    %v1324 = vpop.permute.xlu0 %1323
    %v1326 = vmul.f32 %v1304, %v1324
    %1328 = vrot.lane.b32.xlu0 %v1326, 64
    %v1329 = vpop.permute.xlu0 %1328
    %v1331 = vadd.f32 %v1321, %v1329
    %v1332 = vtanh.pop %v1331
    %1334 = vrot.lane.b32.xlu0 %v1332, 64
    %v1335 = vpop.permute.xlu0 %1334
    %v1337 = vmul.f32 %v1319, %v1335
    %v1338 = vadd.f32 %v1124, %v1337
    %v1339 = vpack.c.bf16 %v1281, %v1281
    %v1340 = vpack.c.bf16 %v1337, %v1337
    %v1342 = vrot.slane %v1339, 2
    %v1344 = vsel %vm744, %v1342, 0
    %1346 = vmatpush.bf16.msra.mxu0 0
    %1347 = vmatpush.bf16.msra.mxu0 0
    %1348 = vmatpush.bf16.msra.mxu0 0
    %1349 = vmatpush.bf16.msra.mxu0 0
    %1350 = vmatpush.bf16.msra.mxu0 %v734
    %1351 = vmatpush.bf16.msra.mxu0 %v732
    %1352 = vmatpush.bf16.msra.mxu0 %v730
    %1353 = vmatpush.bf16.msra.mxu0 %v728
    %1354 = vmatmul.bf16.gmra.mxu0 %v1344
    %v1355 = vpop.f32.mrf.mxu0
    %v1356 = vadd.f32 0.0, %v1355
    %v1357 = vpop.f32.mrf.mxu0
    %1358 = vdwg.mxu0
    %1359 = vmatpush.bf16.msra.mxu0 0
    %1360 = vmatpush.bf16.msra.mxu0 0
    %1361 = vmatpush.bf16.msra.mxu0 0
    %1362 = vmatpush.bf16.msra.mxu0 0
    %1363 = vmatpush.bf16.msra.mxu0 %v735
    %1364 = vmatpush.bf16.msra.mxu0 %v733
    %1365 = vmatpush.bf16.msra.mxu0 %v731
    %1366 = vmatpush.bf16.msra.mxu0 %v729
    %1367 = vmatmul.bf16.gmra.mxu0 %v1344
    %v1368 = vpop.f32.mrf.mxu0
    %v1369 = vadd.f32 0.0, %v1368
    %v1370 = vpop.f32.mrf.mxu0
    %1371 = vdwg.mxu0
    %v1374 = vrot.slane %v1356, 2
    %v1375 = vrot.slane %v1369, 2
    %v1378 = vadd.f32 %v661, %v1374
    %v1379 = vadd.f32 %v675, %v1375
    %v1381 = vsel %vm744, %v1340, 0
    %1383 = vmatpush.bf16.msra.mxu0 0
    %1384 = vmatpush.bf16.msra.mxu0 0
    %1385 = vmatpush.bf16.msra.mxu0 0
    %1386 = vmatpush.bf16.msra.mxu0 0
    %1387 = vmatpush.bf16.msra.mxu0 %v900
    %1388 = vmatpush.bf16.msra.mxu0 %v898
    %1389 = vmatpush.bf16.msra.mxu0 %v896
    %1390 = vmatpush.bf16.msra.mxu0 %v894
    %1391 = vmatmul.bf16.gmra.mxu0 %v1381
    %v1392 = vpop.f32.mrf.mxu0
    %v1393 = vadd.f32 0.0, %v1392
    %v1394 = vpop.f32.mrf.mxu0
    %1395 = vdwg.mxu0
    %1396 = vmatpush.bf16.msra.mxu0 0
    %1397 = vmatpush.bf16.msra.mxu0 0
    %1398 = vmatpush.bf16.msra.mxu0 0
    %1399 = vmatpush.bf16.msra.mxu0 0
    %1400 = vmatpush.bf16.msra.mxu0 %v901
    %1401 = vmatpush.bf16.msra.mxu0 %v899
    %1402 = vmatpush.bf16.msra.mxu0 %v897
    %1403 = vmatpush.bf16.msra.mxu0 %v895
    %1404 = vmatmul.bf16.gmra.mxu0 %v1381
    %v1405 = vpop.f32.mrf.mxu0
    %v1406 = vadd.f32 0.0, %v1405
    %v1407 = vpop.f32.mrf.mxu0
    %1408 = vdwg.mxu0
    %1409 = vmatpush.bf16.msra.mxu0 0
    %1410 = vmatpush.bf16.msra.mxu0 0
    %1411 = vmatpush.bf16.msra.mxu0 0
    %1412 = vmatpush.bf16.msra.mxu0 0
    %1413 = vmatpush.bf16.msra.mxu0 %v966
    %1414 = vmatpush.bf16.msra.mxu0 %v964
    %1415 = vmatpush.bf16.msra.mxu0 %v962
    %1416 = vmatpush.bf16.msra.mxu0 %v960
    %1417 = vmatmul.bf16.gmra.mxu0 %v1344
    %v1418 = vpop.f32.mrf.mxu0
    %v1419 = vadd.f32 %v1393, %v1418
    %v1420 = vpop.f32.mrf.mxu0
    %1421 = vdwg.mxu0
    %1422 = vmatpush.bf16.msra.mxu0 0
    %1423 = vmatpush.bf16.msra.mxu0 0
    %1424 = vmatpush.bf16.msra.mxu0 0
    %1425 = vmatpush.bf16.msra.mxu0 0
    %1426 = vmatpush.bf16.msra.mxu0 %v967
    %1427 = vmatpush.bf16.msra.mxu0 %v965
    %1428 = vmatpush.bf16.msra.mxu0 %v963
    %1429 = vmatpush.bf16.msra.mxu0 %v961
    %1430 = vmatmul.bf16.gmra.mxu0 %v1344
    %v1431 = vpop.f32.mrf.mxu0
    %v1432 = vadd.f32 %v1406, %v1431
    %v1433 = vpop.f32.mrf.mxu0
    %1434 = vdwg.mxu0
    %v1435 = vadd.f32 %v1419, %v1003
    %v1436 = vadd.f32 %v1432, %v1004
    %v1437 = vxor.u32 %v1378, 2147483648
    %v1438 = vxor.u32 %v1379, 2147483648
    %v1439 = vmul.f32 %v1437, 1.442695
    %v1440 = vpow.pop %v1439
    %v1441 = vmul.f32 %v1438, 1.442695
    %v1442 = vpow.pop %v1441
    %v1443 = vadd.f32 %v1440, 1.0
    %v1444 = vadd.f32 %v1442, 1.0
    %v1445 = vrcp.pop %v1443
    %v1446 = vmul.f32 %v1443, %v1445
    %v1447 = vsub.f32 1.0, %v1446
    %v1448 = vmul.f32 %v1445, %v1447
    %v1449 = vadd.f32 %v1445, %v1448
    %vm1450 = vweird.f32 %v1443
    %vm1451 = vweird.f32 %v1445
    %vm1452 = vmor %vm1450, %vm1451
    %v1453 = vsel %vm1452, %v1445, %v1449
    %v1454 = vand.u32 2147483647, %v1443
    %vm1455 = vcmp.eq.f32.partialorder %v1454, 8.507059e+37
    %v1456 = vand.u32 %v1443, 2147483648
    %v1457 = vor.u32 1.1754944e-38, %v1456
    %v1458 = vsel %vm1455, %v1457, %v1453
    %v1459 = vmul.f32 1.0, %v1458
    %v1460 = vrcp.pop %v1444
    %v1461 = vmul.f32 %v1444, %v1460
    %v1462 = vsub.f32 1.0, %v1461
    %v1463 = vmul.f32 %v1460, %v1462
    %v1464 = vadd.f32 %v1460, %v1463
    %vm1465 = vweird.f32 %v1444
    %vm1466 = vweird.f32 %v1460
    %vm1467 = vmor %vm1465, %vm1466
    %v1468 = vsel %vm1467, %v1460, %v1464
    %v1469 = vand.u32 2147483647, %v1444
    %vm1470 = vcmp.eq.f32.partialorder %v1469, 8.507059e+37
    %v1471 = vand.u32 %v1444, 2147483648
    %v1472 = vor.u32 1.1754944e-38, %v1471
    %v1473 = vsel %vm1470, %v1472, %v1468
    %v1474 = vmul.f32 1.0, %v1473
    %v1475 = vtanh.pop %v1379
    %v1477 = vrot.slane %v1275, 6
    %v1479 = vmul.f32 %v1459, %v1477
    %1481 = vrot.lane.b32.xlu0 %v1475, 64
    %v1482 = vpop.permute.xlu0 %1481
    %v1484 = vmul.f32 %v1459, %v1482
    %1486 = vrot.lane.b32.xlu0 %v1484, 64
    %v1487 = vpop.permute.xlu0 %1486
    %v1489 = vadd.f32 %v1479, %v1487
    %v1490 = vtanh.pop %v1489
    %1492 = vrot.lane.b32.xlu0 %v1490, 64
    %v1493 = vpop.permute.xlu0 %1492
    %v1495 = vmul.f32 %v1474, %v1493
    %v1496 = vxor.u32 %v1435, 2147483648
    %v1497 = vxor.u32 %v1436, 2147483648
    %v1498 = vmul.f32 %v1496, 1.442695
    %v1499 = vpow.pop %v1498
    %v1500 = vmul.f32 %v1497, 1.442695
    %v1501 = vpow.pop %v1500
    %v1502 = vadd.f32 %v1499, 1.0
    %v1503 = vadd.f32 %v1501, 1.0
    %v1504 = vrcp.pop %v1502
    %v1505 = vmul.f32 %v1502, %v1504
    %v1506 = vsub.f32 1.0, %v1505
    %v1507 = vmul.f32 %v1504, %v1506
    %v1508 = vadd.f32 %v1504, %v1507
    %vm1509 = vweird.f32 %v1502
    %vm1510 = vweird.f32 %v1504
    %vm1511 = vmor %vm1509, %vm1510
    %v1512 = vsel %vm1511, %v1504, %v1508
    %v1513 = vand.u32 2147483647, %v1502
    %vm1514 = vcmp.eq.f32.partialorder %v1513, 8.507059e+37
    %v1515 = vand.u32 %v1502, 2147483648
    %v1516 = vor.u32 1.1754944e-38, %v1515
    %v1517 = vsel %vm1514, %v1516, %v1512
    %v1518 = vmul.f32 1.0, %v1517
    %v1519 = vrcp.pop %v1503
    %v1520 = vmul.f32 %v1503, %v1519
    %v1521 = vsub.f32 1.0, %v1520
    %v1522 = vmul.f32 %v1519, %v1521
    %v1523 = vadd.f32 %v1519, %v1522
    %vm1524 = vweird.f32 %v1503
    %vm1525 = vweird.f32 %v1519
    %vm1526 = vmor %vm1524, %vm1525
    %v1527 = vsel %vm1526, %v1519, %v1523
    %v1528 = vand.u32 2147483647, %v1503
    %vm1529 = vcmp.eq.f32.partialorder %v1528, 8.507059e+37
    %v1530 = vand.u32 %v1503, 2147483648
    %v1531 = vor.u32 1.1754944e-38, %v1530
    %v1532 = vsel %vm1529, %v1531, %v1527
    %v1533 = vmul.f32 1.0, %v1532
    %v1534 = vtanh.pop %v1436
    %v1535 = vmul.f32 %v1518, %v1331
    %1537 = vrot.lane.b32.xlu0 %v1534, 64
    %v1538 = vpop.permute.xlu0 %1537
    %v1540 = vmul.f32 %v1518, %v1538
    %1542 = vrot.lane.b32.xlu0 %v1540, 64
    %v1543 = vpop.permute.xlu0 %1542
    %v1545 = vadd.f32 %v1535, %v1543
    %v1546 = vtanh.pop %v1545
    %1548 = vrot.lane.b32.xlu0 %v1546, 64
    %v1549 = vpop.permute.xlu0 %1548
    %v1551 = vmul.f32 %v1533, %v1549
    %v1552 = vadd.f32 %v1338, %v1551
    %v1553 = vpack.c.bf16 %v1495, %v1495
    %v1554 = vpack.c.bf16 %v1551, %v1551
    %v1556 = vrot.slane %v1553, 3
    %v1558 = vsel %vm744, %v1556, 0
    %1560 = vmatpush.bf16.msra.mxu0 0
    %1561 = vmatpush.bf16.msra.mxu0 0
    %1562 = vmatpush.bf16.msra.mxu0 0
    %1563 = vmatpush.bf16.msra.mxu0 0
    %1564 = vmatpush.bf16.msra.mxu0 %v734
    %1565 = vmatpush.bf16.msra.mxu0 %v732
    %1566 = vmatpush.bf16.msra.mxu0 %v730
    %1567 = vmatpush.bf16.msra.mxu0 %v728
    %1568 = vmatmul.bf16.gmra.mxu0 %v1558
    %v1569 = vpop.f32.mrf.mxu0
    %v1570 = vadd.f32 0.0, %v1569
    %v1571 = vpop.f32.mrf.mxu0
    %1572 = vdwg.mxu0
    %1573 = vmatpush.bf16.msra.mxu0 0
    %1574 = vmatpush.bf16.msra.mxu0 0
    %1575 = vmatpush.bf16.msra.mxu0 0
    %1576 = vmatpush.bf16.msra.mxu0 0
    %1577 = vmatpush.bf16.msra.mxu0 %v735
    %1578 = vmatpush.bf16.msra.mxu0 %v733
    %1579 = vmatpush.bf16.msra.mxu0 %v731
    %1580 = vmatpush.bf16.msra.mxu0 %v729
    %1581 = vmatmul.bf16.gmra.mxu0 %v1558
    %v1582 = vpop.f32.mrf.mxu0
    %v1583 = vadd.f32 0.0, %v1582
    %v1584 = vpop.f32.mrf.mxu0
    %1585 = vdwg.mxu0
    %v1586 = vadd.f32 %v663, %v1570
    %v1587 = vadd.f32 %v677, %v1583
    %v1589 = vsel %vm744, %v1554, 0
    %1591 = vmatpush.bf16.msra.mxu0 0
    %1592 = vmatpush.bf16.msra.mxu0 0
    %1593 = vmatpush.bf16.msra.mxu0 0
    %1594 = vmatpush.bf16.msra.mxu0 0
    %1595 = vmatpush.bf16.msra.mxu0 %v900
    %1596 = vmatpush.bf16.msra.mxu0 %v898
    %1597 = vmatpush.bf16.msra.mxu0 %v896
    %1598 = vmatpush.bf16.msra.mxu0 %v894
    %1599 = vmatmul.bf16.gmra.mxu0 %v1589
    %v1600 = vpop.f32.mrf.mxu0
    %v1601 = vadd.f32 0.0, %v1600
    %v1602 = vpop.f32.mrf.mxu0
    %1603 = vdwg.mxu0
    %1604 = vmatpush.bf16.msra.mxu0 0
    %1605 = vmatpush.bf16.msra.mxu0 0
    %1606 = vmatpush.bf16.msra.mxu0 0
    %1607 = vmatpush.bf16.msra.mxu0 0
    %1608 = vmatpush.bf16.msra.mxu0 %v901
    %1609 = vmatpush.bf16.msra.mxu0 %v899
    %1610 = vmatpush.bf16.msra.mxu0 %v897
    %1611 = vmatpush.bf16.msra.mxu0 %v895
    %1612 = vmatmul.bf16.gmra.mxu0 %v1589
    %v1613 = vpop.f32.mrf.mxu0
    %v1614 = vadd.f32 0.0, %v1613
    %v1615 = vpop.f32.mrf.mxu0
    %1616 = vdwg.mxu0
    %1617 = vmatpush.bf16.msra.mxu0 0
    %1618 = vmatpush.bf16.msra.mxu0 0
    %1619 = vmatpush.bf16.msra.mxu0 0
    %1620 = vmatpush.bf16.msra.mxu0 0
    %1621 = vmatpush.bf16.msra.mxu0 %v966
    %1622 = vmatpush.bf16.msra.mxu0 %v964
    %1623 = vmatpush.bf16.msra.mxu0 %v962
    %1624 = vmatpush.bf16.msra.mxu0 %v960
    %1625 = vmatmul.bf16.gmra.mxu0 %v1558
    %v1626 = vpop.f32.mrf.mxu0
    %v1627 = vadd.f32 %v1601, %v1626
    %v1628 = vpop.f32.mrf.mxu0
    %1629 = vdwg.mxu0
    %1630 = vmatpush.bf16.msra.mxu0 0
    %1631 = vmatpush.bf16.msra.mxu0 0
    %1632 = vmatpush.bf16.msra.mxu0 0
    %1633 = vmatpush.bf16.msra.mxu0 0
    %1634 = vmatpush.bf16.msra.mxu0 %v967
    %1635 = vmatpush.bf16.msra.mxu0 %v965
    %1636 = vmatpush.bf16.msra.mxu0 %v963
    %1637 = vmatpush.bf16.msra.mxu0 %v961
    %1638 = vmatmul.bf16.gmra.mxu0 %v1558
    %v1639 = vpop.f32.mrf.mxu0
    %v1640 = vadd.f32 %v1614, %v1639
    %v1641 = vpop.f32.mrf.mxu0
    %1642 = vdwg.mxu0
    %v1643 = vadd.f32 %v1627, %v1003
    %v1644 = vadd.f32 %v1640, %v1004
    %v1645 = vxor.u32 %v1586, 2147483648
    %v1646 = vxor.u32 %v1587, 2147483648
    %v1647 = vmul.f32 %v1645, 1.442695
    %v1648 = vpow.pop %v1647
    %v1649 = vmul.f32 %v1646, 1.442695
    %v1650 = vpow.pop %v1649
    %v1651 = vadd.f32 %v1648, 1.0
    %v1652 = vadd.f32 %v1650, 1.0
    %v1653 = vrcp.pop %v1651
    %v1654 = vmul.f32 %v1651, %v1653
    %v1655 = vsub.f32 1.0, %v1654
    %v1656 = vmul.f32 %v1653, %v1655
    %v1657 = vadd.f32 %v1653, %v1656
    %vm1658 = vweird.f32 %v1651
    %vm1659 = vweird.f32 %v1653
    %vm1660 = vmor %vm1658, %vm1659
    %v1661 = vsel %vm1660, %v1653, %v1657
    %v1662 = vand.u32 2147483647, %v1651
    %vm1663 = vcmp.eq.f32.partialorder %v1662, 8.507059e+37
    %v1664 = vand.u32 %v1651, 2147483648
    %v1665 = vor.u32 1.1754944e-38, %v1664
    %v1666 = vsel %vm1663, %v1665, %v1661
    %v1667 = vmul.f32 1.0, %v1666
    %v1668 = vrcp.pop %v1652
    %v1669 = vmul.f32 %v1652, %v1668
    %v1670 = vsub.f32 1.0, %v1669
    %v1671 = vmul.f32 %v1668, %v1670
    %v1672 = vadd.f32 %v1668, %v1671
    %vm1673 = vweird.f32 %v1652
    %vm1674 = vweird.f32 %v1668
    %vm1675 = vmor %vm1673, %vm1674
    %v1676 = vsel %vm1675, %v1668, %v1672
    %v1677 = vand.u32 2147483647, %v1652
    %vm1678 = vcmp.eq.f32.partialorder %v1677, 8.507059e+37
    %v1679 = vand.u32 %v1652, 2147483648
    %v1680 = vor.u32 1.1754944e-38, %v1679
    %v1681 = vsel %vm1678, %v1680, %v1676
    %v1682 = vmul.f32 1.0, %v1681
    %v1683 = vtanh.pop %v1587
    %v1685 = vrot.slane %v1489, 6
    %v1687 = vmul.f32 %v1667, %v1685
    %1689 = vrot.lane.b32.xlu0 %v1683, 64
    %v1690 = vpop.permute.xlu0 %1689
    %v1692 = vmul.f32 %v1667, %v1690
    %1694 = vrot.lane.b32.xlu0 %v1692, 64
    %v1695 = vpop.permute.xlu0 %1694
    %v1697 = vadd.f32 %v1687, %v1695
    %v1698 = vtanh.pop %v1697
    %1700 = vrot.lane.b32.xlu0 %v1698, 64
    %v1701 = vpop.permute.xlu0 %1700
    %v1703 = vmul.f32 %v1682, %v1701
    %v1704 = vxor.u32 %v1643, 2147483648
    %v1705 = vxor.u32 %v1644, 2147483648
    %v1706 = vmul.f32 %v1704, 1.442695
    %v1707 = vpow.pop %v1706
    %v1708 = vmul.f32 %v1705, 1.442695
    %v1709 = vpow.pop %v1708
    %v1710 = vadd.f32 %v1707, 1.0
    %v1711 = vadd.f32 %v1709, 1.0
    %v1712 = vrcp.pop %v1710
    %v1713 = vmul.f32 %v1710, %v1712
    %v1714 = vsub.f32 1.0, %v1713
    %v1715 = vmul.f32 %v1712, %v1714
    %v1716 = vadd.f32 %v1712, %v1715
    %vm1717 = vweird.f32 %v1710
    %vm1718 = vweird.f32 %v1712
    %vm1719 = vmor %vm1717, %vm1718
    %v1720 = vsel %vm1719, %v1712, %v1716
    %v1721 = vand.u32 2147483647, %v1710
    %vm1722 = vcmp.eq.f32.partialorder %v1721, 8.507059e+37
    %v1723 = vand.u32 %v1710, 2147483648
    %v1724 = vor.u32 1.1754944e-38, %v1723
    %v1725 = vsel %vm1722, %v1724, %v1720
    %v1726 = vmul.f32 1.0, %v1725
    %v1727 = vrcp.pop %v1711
    %v1728 = vmul.f32 %v1711, %v1727
    %v1729 = vsub.f32 1.0, %v1728
    %v1730 = vmul.f32 %v1727, %v1729
    %v1731 = vadd.f32 %v1727, %v1730
    %vm1732 = vweird.f32 %v1711
    %vm1733 = vweird.f32 %v1727
    %vm1734 = vmor %vm1732, %vm1733
    %v1735 = vsel %vm1734, %v1727, %v1731
    %v1736 = vand.u32 2147483647, %v1711
    %vm1737 = vcmp.eq.f32.partialorder %v1736, 8.507059e+37
    %v1738 = vand.u32 %v1711, 2147483648
    %v1739 = vor.u32 1.1754944e-38, %v1738
    %v1740 = vsel %vm1737, %v1739, %v1735
    %v1741 = vmul.f32 1.0, %v1740
    %v1742 = vtanh.pop %v1644
    %v1743 = vmul.f32 %v1726, %v1545
    %1745 = vrot.lane.b32.xlu0 %v1742, 64
    %v1746 = vpop.permute.xlu0 %1745
    %v1748 = vmul.f32 %v1726, %v1746
    %1750 = vrot.lane.b32.xlu0 %v1748, 64
    %v1751 = vpop.permute.xlu0 %1750
    %v1753 = vadd.f32 %v1743, %v1751
    %v1754 = vtanh.pop %v1753
    %1756 = vrot.lane.b32.xlu0 %v1754, 64
    %v1757 = vpop.permute.xlu0 %1756
    %v1759 = vmul.f32 %v1741, %v1757
    %v1760 = vadd.f32 %v1552, %v1759
    %v1761 = vpack.c.bf16 %v1703, %v1703
    %v1762 = vpack.c.bf16 %v1759, %v1759
    %v1764 = vsel %vm744, %v1761, 0
    %1766 = vmatpush.bf16.msra.mxu0 0
    %1767 = vmatpush.bf16.msra.mxu0 0
    %1768 = vmatpush.bf16.msra.mxu0 0
    %1769 = vmatpush.bf16.msra.mxu0 0
    %1770 = vmatpush.bf16.msra.mxu0 %v734
    %1771 = vmatpush.bf16.msra.mxu0 %v732
    %1772 = vmatpush.bf16.msra.mxu0 %v730
    %1773 = vmatpush.bf16.msra.mxu0 %v728
    %1774 = vmatmul.bf16.gmra.mxu0 %v1764
    %v1775 = vpop.f32.mrf.mxu0
    %v1776 = vadd.f32 0.0, %v1775
    %v1777 = vpop.f32.mrf.mxu0
    %1778 = vdwg.mxu0
    %1779 = vmatpush.bf16.msra.mxu0 0
    %1780 = vmatpush.bf16.msra.mxu0 0
    %1781 = vmatpush.bf16.msra.mxu0 0
    %1782 = vmatpush.bf16.msra.mxu0 0
    %1783 = vmatpush.bf16.msra.mxu0 %v735
    %1784 = vmatpush.bf16.msra.mxu0 %v733
    %1785 = vmatpush.bf16.msra.mxu0 %v731
    %1786 = vmatpush.bf16.msra.mxu0 %v729
    %1787 = vmatmul.bf16.gmra.mxu0 %v1764
    %v1788 = vpop.f32.mrf.mxu0
    %v1789 = vadd.f32 0.0, %v1788
    %v1790 = vpop.f32.mrf.mxu0
    %1791 = vdwg.mxu0
    %v1794 = vrot.slane %v1776, 6
    %v1795 = vrot.slane %v1789, 6
    %v1798 = vadd.f32 %v663, %v1794
    %v1799 = vadd.f32 %v677, %v1795
    %v1801 = vsel %vm744, %v1762, 0
    %1803 = vmatpush.bf16.msra.mxu0 0
    %1804 = vmatpush.bf16.msra.mxu0 0
    %1805 = vmatpush.bf16.msra.mxu0 0
    %1806 = vmatpush.bf16.msra.mxu0 0
    %1807 = vmatpush.bf16.msra.mxu0 %v900
    %1808 = vmatpush.bf16.msra.mxu0 %v898
    %1809 = vmatpush.bf16.msra.mxu0 %v896
    %1810 = vmatpush.bf16.msra.mxu0 %v894
    %1811 = vmatmul.bf16.gmra.mxu0 %v1801
    %v1812 = vpop.f32.mrf.mxu0
    %v1813 = vadd.f32 0.0, %v1812
    %v1814 = vpop.f32.mrf.mxu0
    %1815 = vdwg.mxu0
    %1816 = vmatpush.bf16.msra.mxu0 0
    %1817 = vmatpush.bf16.msra.mxu0 0
    %1818 = vmatpush.bf16.msra.mxu0 0
    %1819 = vmatpush.bf16.msra.mxu0 0
    %1820 = vmatpush.bf16.msra.mxu0 %v901
    %1821 = vmatpush.bf16.msra.mxu0 %v899
    %1822 = vmatpush.bf16.msra.mxu0 %v897
    %1823 = vmatpush.bf16.msra.mxu0 %v895
    %1824 = vmatmul.bf16.gmra.mxu0 %v1801
    %v1825 = vpop.f32.mrf.mxu0
    %v1826 = vadd.f32 0.0, %v1825
    %v1827 = vpop.f32.mrf.mxu0
    %1828 = vdwg.mxu0
    %1829 = vmatpush.bf16.msra.mxu0 0
    %1830 = vmatpush.bf16.msra.mxu0 0
    %1831 = vmatpush.bf16.msra.mxu0 0
    %1832 = vmatpush.bf16.msra.mxu0 0
    %1833 = vmatpush.bf16.msra.mxu0 %v966
    %1834 = vmatpush.bf16.msra.mxu0 %v964
    %1835 = vmatpush.bf16.msra.mxu0 %v962
    %1836 = vmatpush.bf16.msra.mxu0 %v960
    %1837 = vmatmul.bf16.gmra.mxu0 %v1764
    %v1838 = vpop.f32.mrf.mxu0
    %v1839 = vadd.f32 %v1813, %v1838
    %v1840 = vpop.f32.mrf.mxu0
    %1841 = vdwg.mxu0
    %1842 = vmatpush.bf16.msra.mxu0 0
    %1843 = vmatpush.bf16.msra.mxu0 0
    %1844 = vmatpush.bf16.msra.mxu0 0
    %1845 = vmatpush.bf16.msra.mxu0 0
    %1846 = vmatpush.bf16.msra.mxu0 %v967
    %1847 = vmatpush.bf16.msra.mxu0 %v965
    %1848 = vmatpush.bf16.msra.mxu0 %v963
    %1849 = vmatpush.bf16.msra.mxu0 %v961
    %1850 = vmatmul.bf16.gmra.mxu0 %v1764
    %v1851 = vpop.f32.mrf.mxu0
    %v1852 = vadd.f32 %v1826, %v1851
    %v1853 = vpop.f32.mrf.mxu0
    %1854 = vdwg.mxu0
    %v1855 = vadd.f32 %v1839, %v1003
    %v1856 = vadd.f32 %v1852, %v1004
    %v1857 = vxor.u32 %v1798, 2147483648
    %v1858 = vxor.u32 %v1799, 2147483648
    %v1859 = vmul.f32 %v1857, 1.442695
    %v1860 = vpow.pop %v1859
    %v1861 = vmul.f32 %v1858, 1.442695
    %v1862 = vpow.pop %v1861
    %v1863 = vadd.f32 %v1860, 1.0
    %v1864 = vadd.f32 %v1862, 1.0
    %v1865 = vrcp.pop %v1863
    %v1866 = vmul.f32 %v1863, %v1865
    %v1867 = vsub.f32 1.0, %v1866
    %v1868 = vmul.f32 %v1865, %v1867
    %v1869 = vadd.f32 %v1865, %v1868
    %vm1870 = vweird.f32 %v1863
    %vm1871 = vweird.f32 %v1865
    %vm1872 = vmor %vm1870, %vm1871
    %v1873 = vsel %vm1872, %v1865, %v1869
    %v1874 = vand.u32 2147483647, %v1863
    %vm1875 = vcmp.eq.f32.partialorder %v1874, 8.507059e+37
    %v1876 = vand.u32 %v1863, 2147483648
    %v1877 = vor.u32 1.1754944e-38, %v1876
    %v1878 = vsel %vm1875, %v1877, %v1873
    %v1879 = vmul.f32 1.0, %v1878
    %v1880 = vrcp.pop %v1864
    %v1881 = vmul.f32 %v1864, %v1880
    %v1882 = vsub.f32 1.0, %v1881
    %v1883 = vmul.f32 %v1880, %v1882
    %v1884 = vadd.f32 %v1880, %v1883
    %vm1885 = vweird.f32 %v1864
    %vm1886 = vweird.f32 %v1880
    %vm1887 = vmor %vm1885, %vm1886
    %v1888 = vsel %vm1887, %v1880, %v1884
    %v1889 = vand.u32 2147483647, %v1864
    %vm1890 = vcmp.eq.f32.partialorder %v1889, 8.507059e+37
    %v1891 = vand.u32 %v1864, 2147483648
    %v1892 = vor.u32 1.1754944e-38, %v1891
    %v1893 = vsel %vm1890, %v1892, %v1888
    %v1894 = vmul.f32 1.0, %v1893
    %v1895 = vtanh.pop %v1799
    %v1897 = vrot.slane %v1697, 6
    %v1899 = vmul.f32 %v1879, %v1897
    %1901 = vrot.lane.b32.xlu0 %v1895, 64
    %v1902 = vpop.permute.xlu0 %1901
    %v1904 = vmul.f32 %v1879, %v1902
    %1906 = vrot.lane.b32.xlu0 %v1904, 64
    %v1907 = vpop.permute.xlu0 %1906
    %v1909 = vadd.f32 %v1899, %v1907
    %v1910 = vtanh.pop %v1909
    %1912 = vrot.lane.b32.xlu0 %v1910, 64
    %v1913 = vpop.permute.xlu0 %1912
    %v1915 = vmul.f32 %v1894, %v1913
    %v1916 = vxor.u32 %v1855, 2147483648
    %v1917 = vxor.u32 %v1856, 2147483648
    %v1918 = vmul.f32 %v1916, 1.442695
    %v1919 = vpow.pop %v1918
    %v1920 = vmul.f32 %v1917, 1.442695
    %v1921 = vpow.pop %v1920
    %v1922 = vadd.f32 %v1919, 1.0
    %v1923 = vadd.f32 %v1921, 1.0
    %v1924 = vrcp.pop %v1922
    %v1925 = vmul.f32 %v1922, %v1924
    %v1926 = vsub.f32 1.0, %v1925
    %v1927 = vmul.f32 %v1924, %v1926
    %v1928 = vadd.f32 %v1924, %v1927
    %vm1929 = vweird.f32 %v1922
    %vm1930 = vweird.f32 %v1924
    %vm1931 = vmor %vm1929, %vm1930
    %v1932 = vsel %vm1931, %v1924, %v1928
    %v1933 = vand.u32 2147483647, %v1922
    %vm1934 = vcmp.eq.f32.partialorder %v1933, 8.507059e+37
    %v1935 = vand.u32 %v1922, 2147483648
    %v1936 = vor.u32 1.1754944e-38, %v1935
    %v1937 = vsel %vm1934, %v1936, %v1932
    %v1938 = vmul.f32 1.0, %v1937
    %v1939 = vrcp.pop %v1923
    %v1940 = vmul.f32 %v1923, %v1939
    %v1941 = vsub.f32 1.0, %v1940
    %v1942 = vmul.f32 %v1939, %v1941
    %v1943 = vadd.f32 %v1939, %v1942
    %vm1944 = vweird.f32 %v1923
    %vm1945 = vweird.f32 %v1939
    %vm1946 = vmor %vm1944, %vm1945
    %v1947 = vsel %vm1946, %v1939, %v1943
    %v1948 = vand.u32 2147483647, %v1923
    %vm1949 = vcmp.eq.f32.partialorder %v1948, 8.507059e+37
    %v1950 = vand.u32 %v1923, 2147483648
    %v1951 = vor.u32 1.1754944e-38, %v1950
    %v1952 = vsel %vm1949, %v1951, %v1947
    %v1953 = vmul.f32 1.0, %v1952
    %v1954 = vtanh.pop %v1856
    %v1955 = vmul.f32 %v1938, %v1753
    %1957 = vrot.lane.b32.xlu0 %v1954, 64
    %v1958 = vpop.permute.xlu0 %1957
    %v1960 = vmul.f32 %v1938, %v1958
    %1962 = vrot.lane.b32.xlu0 %v1960, 64
    %v1963 = vpop.permute.xlu0 %1962
    %v1965 = vadd.f32 %v1955, %v1963
    %v1966 = vtanh.pop %v1965
    %1968 = vrot.lane.b32.xlu0 %v1966, 64
    %v1969 = vpop.permute.xlu0 %1968
    %v1971 = vmul.f32 %v1953, %v1969
    %v1972 = vadd.f32 %v1760, %v1971
    %v1973 = vpack.c.bf16 %v1915, %v1915
    %v1974 = vpack.c.bf16 %v1971, %v1971
    %v1976 = vrot.slane %v1973, 1
    %v1978 = vsel %vm744, %v1976, 0
    %1980 = vmatpush.bf16.msra.mxu0 0
    %1981 = vmatpush.bf16.msra.mxu0 0
    %1982 = vmatpush.bf16.msra.mxu0 0
    %1983 = vmatpush.bf16.msra.mxu0 0
    %1984 = vmatpush.bf16.msra.mxu0 %v734
    %1985 = vmatpush.bf16.msra.mxu0 %v732
    %1986 = vmatpush.bf16.msra.mxu0 %v730
    %1987 = vmatpush.bf16.msra.mxu0 %v728
    %1988 = vmatmul.bf16.gmra.mxu0 %v1978
    %v1989 = vpop.f32.mrf.mxu0
    %v1990 = vadd.f32 0.0, %v1989
    %v1991 = vpop.f32.mrf.mxu0
    %1992 = vdwg.mxu0
    %1993 = vmatpush.bf16.msra.mxu0 0
    %1994 = vmatpush.bf16.msra.mxu0 0
    %1995 = vmatpush.bf16.msra.mxu0 0
    %1996 = vmatpush.bf16.msra.mxu0 0
    %1997 = vmatpush.bf16.msra.mxu0 %v735
    %1998 = vmatpush.bf16.msra.mxu0 %v733
    %1999 = vmatpush.bf16.msra.mxu0 %v731
    %2000 = vmatpush.bf16.msra.mxu0 %v729
    %2001 = vmatmul.bf16.gmra.mxu0 %v1978
    %v2002 = vpop.f32.mrf.mxu0
    %v2003 = vadd.f32 0.0, %v2002
    %v2004 = vpop.f32.mrf.mxu0
    %2005 = vdwg.mxu0
    %v2008 = vrot.slane %v1990, 4
    %v2009 = vrot.slane %v2003, 4
    %v2012 = vadd.f32 %v663, %v2008
    %v2013 = vadd.f32 %v677, %v2009
    %v2015 = vsel %vm744, %v1974, 0
    %2017 = vmatpush.bf16.msra.mxu0 0
    %2018 = vmatpush.bf16.msra.mxu0 0
    %2019 = vmatpush.bf16.msra.mxu0 0
    %2020 = vmatpush.bf16.msra.mxu0 0
    %2021 = vmatpush.bf16.msra.mxu0 %v900
    %2022 = vmatpush.bf16.msra.mxu0 %v898
    %2023 = vmatpush.bf16.msra.mxu0 %v896
    %2024 = vmatpush.bf16.msra.mxu0 %v894
    %2025 = vmatmul.bf16.gmra.mxu0 %v2015
    %v2026 = vpop.f32.mrf.mxu0
    %v2027 = vadd.f32 0.0, %v2026
    %v2028 = vpop.f32.mrf.mxu0
    %2029 = vdwg.mxu0
    %2030 = vmatpush.bf16.msra.mxu0 0
    %2031 = vmatpush.bf16.msra.mxu0 0
    %2032 = vmatpush.bf16.msra.mxu0 0
    %2033 = vmatpush.bf16.msra.mxu0 0
    %2034 = vmatpush.bf16.msra.mxu0 %v901
    %2035 = vmatpush.bf16.msra.mxu0 %v899
    %2036 = vmatpush.bf16.msra.mxu0 %v897
    %2037 = vmatpush.bf16.msra.mxu0 %v895
    %2038 = vmatmul.bf16.gmra.mxu0 %v2015
    %v2039 = vpop.f32.mrf.mxu0
    %v2040 = vadd.f32 0.0, %v2039
    %v2041 = vpop.f32.mrf.mxu0
    %2042 = vdwg.mxu0
    %2043 = vmatpush.bf16.msra.mxu0 0
    %2044 = vmatpush.bf16.msra.mxu0 0
    %2045 = vmatpush.bf16.msra.mxu0 0
    %2046 = vmatpush.bf16.msra.mxu0 0
    %2047 = vmatpush.bf16.msra.mxu0 %v966
    %2048 = vmatpush.bf16.msra.mxu0 %v964
    %2049 = vmatpush.bf16.msra.mxu0 %v962
    %2050 = vmatpush.bf16.msra.mxu0 %v960
    %2051 = vmatmul.bf16.gmra.mxu0 %v1978
    %v2052 = vpop.f32.mrf.mxu0
    %v2053 = vadd.f32 %v2027, %v2052
    %v2054 = vpop.f32.mrf.mxu0
    %2055 = vdwg.mxu0
    %2056 = vmatpush.bf16.msra.mxu0 0
    %2057 = vmatpush.bf16.msra.mxu0 0
    %2058 = vmatpush.bf16.msra.mxu0 0
    %2059 = vmatpush.bf16.msra.mxu0 0
    %2060 = vmatpush.bf16.msra.mxu0 %v967
    %2061 = vmatpush.bf16.msra.mxu0 %v965
    %2062 = vmatpush.bf16.msra.mxu0 %v963
    %2063 = vmatpush.bf16.msra.mxu0 %v961
    %2064 = vmatmul.bf16.gmra.mxu0 %v1978
    %v2065 = vpop.f32.mrf.mxu0
    %v2066 = vadd.f32 %v2040, %v2065
    %v2067 = vpop.f32.mrf.mxu0
    %2068 = vdwg.mxu0
    %v2069 = vadd.f32 %v2053, %v1003
    %v2070 = vadd.f32 %v2066, %v1004
    %v2071 = vxor.u32 %v2012, 2147483648
    %v2072 = vxor.u32 %v2013, 2147483648
    %v2073 = vmul.f32 %v2071, 1.442695
    %v2074 = vpow.pop %v2073
    %v2075 = vmul.f32 %v2072, 1.442695
    %v2076 = vpow.pop %v2075
    %v2077 = vadd.f32 %v2074, 1.0
    %v2078 = vadd.f32 %v2076, 1.0
    %v2079 = vrcp.pop %v2077
    %v2080 = vmul.f32 %v2077, %v2079
    %v2081 = vsub.f32 1.0, %v2080
    %v2082 = vmul.f32 %v2079, %v2081
    %v2083 = vadd.f32 %v2079, %v2082
    %vm2084 = vweird.f32 %v2077
    %vm2085 = vweird.f32 %v2079
    %vm2086 = vmor %vm2084, %vm2085
    %v2087 = vsel %vm2086, %v2079, %v2083
    %v2088 = vand.u32 2147483647, %v2077
    %vm2089 = vcmp.eq.f32.partialorder %v2088, 8.507059e+37
    %v2090 = vand.u32 %v2077, 2147483648
    %v2091 = vor.u32 1.1754944e-38, %v2090
    %v2092 = vsel %vm2089, %v2091, %v2087
    %v2093 = vmul.f32 1.0, %v2092
    %v2094 = vrcp.pop %v2078
    %v2095 = vmul.f32 %v2078, %v2094
    %v2096 = vsub.f32 1.0, %v2095
    %v2097 = vmul.f32 %v2094, %v2096
    %v2098 = vadd.f32 %v2094, %v2097
    %vm2099 = vweird.f32 %v2078
    %vm2100 = vweird.f32 %v2094
    %vm2101 = vmor %vm2099, %vm2100
    %v2102 = vsel %vm2101, %v2094, %v2098
    %v2103 = vand.u32 2147483647, %v2078
    %vm2104 = vcmp.eq.f32.partialorder %v2103, 8.507059e+37
    %v2105 = vand.u32 %v2078, 2147483648
    %v2106 = vor.u32 1.1754944e-38, %v2105
    %v2107 = vsel %vm2104, %v2106, %v2102
    %v2108 = vmul.f32 1.0, %v2107
    %v2109 = vtanh.pop %v2013
    %v2111 = vrot.slane %v1909, 6
    %v2113 = vmul.f32 %v2093, %v2111
    %2115 = vrot.lane.b32.xlu0 %v2109, 64
    %v2116 = vpop.permute.xlu0 %2115
    %v2118 = vmul.f32 %v2093, %v2116
    %2120 = vrot.lane.b32.xlu0 %v2118, 64
    %v2121 = vpop.permute.xlu0 %2120
    %v2123 = vadd.f32 %v2113, %v2121
    %v2124 = vtanh.pop %v2123
    %2126 = vrot.lane.b32.xlu0 %v2124, 64
    %v2127 = vpop.permute.xlu0 %2126
    %v2129 = vmul.f32 %v2108, %v2127
    %v2130 = vxor.u32 %v2069, 2147483648
    %v2131 = vxor.u32 %v2070, 2147483648
    %v2132 = vmul.f32 %v2130, 1.442695
    %v2133 = vpow.pop %v2132
    %v2134 = vmul.f32 %v2131, 1.442695
    %v2135 = vpow.pop %v2134
    %v2136 = vadd.f32 %v2133, 1.0
    %v2137 = vadd.f32 %v2135, 1.0
    %v2138 = vrcp.pop %v2136
    %v2139 = vmul.f32 %v2136, %v2138
    %v2140 = vsub.f32 1.0, %v2139
    %v2141 = vmul.f32 %v2138, %v2140
    %v2142 = vadd.f32 %v2138, %v2141
    %vm2143 = vweird.f32 %v2136
    %vm2144 = vweird.f32 %v2138
    %vm2145 = vmor %vm2143, %vm2144
    %v2146 = vsel %vm2145, %v2138, %v2142
    %v2147 = vand.u32 2147483647, %v2136
    %vm2148 = vcmp.eq.f32.partialorder %v2147, 8.507059e+37
    %v2149 = vand.u32 %v2136, 2147483648
    %v2150 = vor.u32 1.1754944e-38, %v2149
    %v2151 = vsel %vm2148, %v2150, %v2146
    %v2152 = vmul.f32 1.0, %v2151
    %v2153 = vrcp.pop %v2137
    %v2154 = vmul.f32 %v2137, %v2153
    %v2155 = vsub.f32 1.0, %v2154
    %v2156 = vmul.f32 %v2153, %v2155
    %v2157 = vadd.f32 %v2153, %v2156
    %vm2158 = vweird.f32 %v2137
    %vm2159 = vweird.f32 %v2153
    %vm2160 = vmor %vm2158, %vm2159
    %v2161 = vsel %vm2160, %v2153, %v2157
    %v2162 = vand.u32 2147483647, %v2137
    %vm2163 = vcmp.eq.f32.partialorder %v2162, 8.507059e+37
    %v2164 = vand.u32 %v2137, 2147483648
    %v2165 = vor.u32 1.1754944e-38, %v2164
    %v2166 = vsel %vm2163, %v2165, %v2161
    %v2167 = vmul.f32 1.0, %v2166
    %v2168 = vtanh.pop %v2070
    %v2169 = vmul.f32 %v2152, %v1965
    %2171 = vrot.lane.b32.xlu0 %v2168, 64
    %v2172 = vpop.permute.xlu0 %2171
    %v2174 = vmul.f32 %v2152, %v2172
    %2176 = vrot.lane.b32.xlu0 %v2174, 64
    %v2177 = vpop.permute.xlu0 %2176
    %v2179 = vadd.f32 %v2169, %v2177
    %v2180 = vtanh.pop %v2179
    %2182 = vrot.lane.b32.xlu0 %v2180, 64
    %v2183 = vpop.permute.xlu0 %2182
    %v2185 = vmul.f32 %v2167, %v2183
    %v2186 = vadd.f32 %v1972, %v2185
    %v2187 = vpack.c.bf16 %v2129, %v2129
    %v2188 = vpack.c.bf16 %v2185, %v2185
    %v2190 = vrot.slane %v2187, 2
    %v2192 = vsel %vm744, %v2190, 0
    %2194 = vmatpush.bf16.msra.mxu0 0
    %2195 = vmatpush.bf16.msra.mxu0 0
    %2196 = vmatpush.bf16.msra.mxu0 0
    %2197 = vmatpush.bf16.msra.mxu0 0
    %2198 = vmatpush.bf16.msra.mxu0 %v734
    %2199 = vmatpush.bf16.msra.mxu0 %v732
    %2200 = vmatpush.bf16.msra.mxu0 %v730
    %2201 = vmatpush.bf16.msra.mxu0 %v728
    %2202 = vmatmul.bf16.gmra.mxu0 %v2192
    %v2203 = vpop.f32.mrf.mxu0
    %v2204 = vadd.f32 0.0, %v2203
    %v2205 = vpop.f32.mrf.mxu0
    %2206 = vdwg.mxu0
    %2207 = vmatpush.bf16.msra.mxu0 0
    %2208 = vmatpush.bf16.msra.mxu0 0
    %2209 = vmatpush.bf16.msra.mxu0 0
    %2210 = vmatpush.bf16.msra.mxu0 0
    %2211 = vmatpush.bf16.msra.mxu0 %v735
    %2212 = vmatpush.bf16.msra.mxu0 %v733
    %2213 = vmatpush.bf16.msra.mxu0 %v731
    %2214 = vmatpush.bf16.msra.mxu0 %v729
    %2215 = vmatmul.bf16.gmra.mxu0 %v2192
    %v2216 = vpop.f32.mrf.mxu0
    %v2217 = vadd.f32 0.0, %v2216
    %v2218 = vpop.f32.mrf.mxu0
    %2219 = vdwg.mxu0
    %v2222 = vrot.slane %v2204, 2
    %v2223 = vrot.slane %v2217, 2
    %v2226 = vadd.f32 %v663, %v2222
    %v2227 = vadd.f32 %v677, %v2223
    %v2229 = vsel %vm744, %v2188, 0
    %2231 = vmatpush.bf16.msra.mxu0 0
    %2232 = vmatpush.bf16.msra.mxu0 0
    %2233 = vmatpush.bf16.msra.mxu0 0
    %2234 = vmatpush.bf16.msra.mxu0 0
    %2235 = vmatpush.bf16.msra.mxu0 %v900
    %2236 = vmatpush.bf16.msra.mxu0 %v898
    %2237 = vmatpush.bf16.msra.mxu0 %v896
    %2238 = vmatpush.bf16.msra.mxu0 %v894
    %2239 = vmatmul.bf16.gmra.mxu0 %v2229
    %v2240 = vpop.f32.mrf.mxu0
    %v2241 = vadd.f32 0.0, %v2240
    %v2242 = vpop.f32.mrf.mxu0
    %2243 = vdwg.mxu0
    %2244 = vmatpush.bf16.msra.mxu0 0
    %2245 = vmatpush.bf16.msra.mxu0 0
    %2246 = vmatpush.bf16.msra.mxu0 0
    %2247 = vmatpush.bf16.msra.mxu0 0
    %2248 = vmatpush.bf16.msra.mxu0 %v901
    %2249 = vmatpush.bf16.msra.mxu0 %v899
    %2250 = vmatpush.bf16.msra.mxu0 %v897
    %2251 = vmatpush.bf16.msra.mxu0 %v895
    %2252 = vmatmul.bf16.gmra.mxu0 %v2229
    %v2253 = vpop.f32.mrf.mxu0
    %v2254 = vadd.f32 0.0, %v2253
    %v2255 = vpop.f32.mrf.mxu0
    %2256 = vdwg.mxu0
    %2257 = vmatpush.bf16.msra.mxu0 0
    %2258 = vmatpush.bf16.msra.mxu0 0
    %2259 = vmatpush.bf16.msra.mxu0 0
    %2260 = vmatpush.bf16.msra.mxu0 0
    %2261 = vmatpush.bf16.msra.mxu0 %v966
    %2262 = vmatpush.bf16.msra.mxu0 %v964
    %2263 = vmatpush.bf16.msra.mxu0 %v962
    %2264 = vmatpush.bf16.msra.mxu0 %v960
    %2265 = vmatmul.bf16.gmra.mxu0 %v2192
    %v2266 = vpop.f32.mrf.mxu0
    %v2267 = vadd.f32 %v2241, %v2266
    %v2268 = vpop.f32.mrf.mxu0
    %2269 = vdwg.mxu0
    %2270 = vmatpush.bf16.msra.mxu0 0
    %2271 = vmatpush.bf16.msra.mxu0 0
    %2272 = vmatpush.bf16.msra.mxu0 0
    %2273 = vmatpush.bf16.msra.mxu0 0
    %2274 = vmatpush.bf16.msra.mxu0 %v967
    %2275 = vmatpush.bf16.msra.mxu0 %v965
    %2276 = vmatpush.bf16.msra.mxu0 %v963
    %2277 = vmatpush.bf16.msra.mxu0 %v961
    %2278 = vmatmul.bf16.gmra.mxu0 %v2192
    %v2279 = vpop.f32.mrf.mxu0
    %v2280 = vadd.f32 %v2254, %v2279
    %v2281 = vpop.f32.mrf.mxu0
    %2282 = vdwg.mxu0
    %v2283 = vadd.f32 %v2267, %v1003
    %v2284 = vadd.f32 %v2280, %v1004
    %v2285 = vxor.u32 %v2226, 2147483648
    %v2286 = vxor.u32 %v2227, 2147483648
    %v2287 = vmul.f32 %v2285, 1.442695
    %v2288 = vpow.pop %v2287
    %v2289 = vmul.f32 %v2286, 1.442695
    %v2290 = vpow.pop %v2289
    %v2291 = vadd.f32 %v2288, 1.0
    %v2292 = vadd.f32 %v2290, 1.0
    %v2293 = vrcp.pop %v2291
    %v2294 = vmul.f32 %v2291, %v2293
    %v2295 = vsub.f32 1.0, %v2294
    %v2296 = vmul.f32 %v2293, %v2295
    %v2297 = vadd.f32 %v2293, %v2296
    %vm2298 = vweird.f32 %v2291
    %vm2299 = vweird.f32 %v2293
    %vm2300 = vmor %vm2298, %vm2299
    %v2301 = vsel %vm2300, %v2293, %v2297
    %v2302 = vand.u32 2147483647, %v2291
    %vm2303 = vcmp.eq.f32.partialorder %v2302, 8.507059e+37
    %v2304 = vand.u32 %v2291, 2147483648
    %v2305 = vor.u32 1.1754944e-38, %v2304
    %v2306 = vsel %vm2303, %v2305, %v2301
    %v2307 = vmul.f32 1.0, %v2306
    %v2308 = vrcp.pop %v2292
    %v2309 = vmul.f32 %v2292, %v2308
    %v2310 = vsub.f32 1.0, %v2309
    %v2311 = vmul.f32 %v2308, %v2310
    %v2312 = vadd.f32 %v2308, %v2311
    %vm2313 = vweird.f32 %v2292
    %vm2314 = vweird.f32 %v2308
    %vm2315 = vmor %vm2313, %vm2314
    %v2316 = vsel %vm2315, %v2308, %v2312
    %v2317 = vand.u32 2147483647, %v2292
    %vm2318 = vcmp.eq.f32.partialorder %v2317, 8.507059e+37
    %v2319 = vand.u32 %v2292, 2147483648
    %v2320 = vor.u32 1.1754944e-38, %v2319
    %v2321 = vsel %vm2318, %v2320, %v2316
    %v2322 = vmul.f32 1.0, %v2321
    %v2323 = vtanh.pop %v2227
    %v2325 = vrot.slane %v2123, 6
    %v2327 = vmul.f32 %v2307, %v2325
    %2329 = vrot.lane.b32.xlu0 %v2323, 64
    %v2330 = vpop.permute.xlu0 %2329
    %v2332 = vmul.f32 %v2307, %v2330
    %2334 = vrot.lane.b32.xlu0 %v2332, 64
    %v2335 = vpop.permute.xlu0 %2334
    %v2337 = vadd.f32 %v2327, %v2335
    %v2338 = vtanh.pop %v2337
    %2340 = vrot.lane.b32.xlu0 %v2338, 64
    %v2341 = vpop.permute.xlu0 %2340
    %v2343 = vmul.f32 %v2322, %v2341
    %v2344 = vxor.u32 %v2283, 2147483648
    %v2345 = vxor.u32 %v2284, 2147483648
    %v2346 = vmul.f32 %v2344, 1.442695
    %v2347 = vpow.pop %v2346
    %v2348 = vmul.f32 %v2345, 1.442695
    %v2349 = vpow.pop %v2348
    %v2350 = vadd.f32 %v2347, 1.0
    %v2351 = vadd.f32 %v2349, 1.0
    %v2352 = vrcp.pop %v2350
    %v2353 = vmul.f32 %v2350, %v2352
    %v2354 = vsub.f32 1.0, %v2353
    %v2355 = vmul.f32 %v2352, %v2354
    %v2356 = vadd.f32 %v2352, %v2355
    %vm2357 = vweird.f32 %v2350
    %vm2358 = vweird.f32 %v2352
    %vm2359 = vmor %vm2357, %vm2358
    %v2360 = vsel %vm2359, %v2352, %v2356
    %v2361 = vand.u32 2147483647, %v2350
    %vm2362 = vcmp.eq.f32.partialorder %v2361, 8.507059e+37
    %v2363 = vand.u32 %v2350, 2147483648
    %v2364 = vor.u32 1.1754944e-38, %v2363
    %v2365 = vsel %vm2362, %v2364, %v2360
    %v2366 = vmul.f32 1.0, %v2365
    %v2367 = vrcp.pop %v2351
    %v2368 = vmul.f32 %v2351, %v2367
    %v2369 = vsub.f32 1.0, %v2368
    %v2370 = vmul.f32 %v2367, %v2369
    %v2371 = vadd.f32 %v2367, %v2370
    %vm2372 = vweird.f32 %v2351
    %vm2373 = vweird.f32 %v2367
    %vm2374 = vmor %vm2372, %vm2373
    %v2375 = vsel %vm2374, %v2367, %v2371
    %v2376 = vand.u32 2147483647, %v2351
    %vm2377 = vcmp.eq.f32.partialorder %v2376, 8.507059e+37
    %v2378 = vand.u32 %v2351, 2147483648
    %v2379 = vor.u32 1.1754944e-38, %v2378
    %v2380 = vsel %vm2377, %v2379, %v2375
    %v2381 = vmul.f32 1.0, %v2380
    %v2382 = vtanh.pop %v2284
    %v2383 = vmul.f32 %v2366, %v2179
    %2385 = vrot.lane.b32.xlu0 %v2382, 64
    %v2386 = vpop.permute.xlu0 %2385
    %v2388 = vmul.f32 %v2366, %v2386
    %2390 = vrot.lane.b32.xlu0 %v2388, 64
    %v2391 = vpop.permute.xlu0 %2390
    %v2393 = vadd.f32 %v2383, %v2391
    %v2394 = vtanh.pop %v2393
    %2396 = vrot.lane.b32.xlu0 %v2394, 64
    %v2397 = vpop.permute.xlu0 %2396
    %v2399 = vmul.f32 %v2381, %v2397
    %v2400 = vadd.f32 %v2186, %v2399
    %v2401 = vpack.c.bf16 %v2343, %v2343
    %v2402 = vpack.c.bf16 %v2399, %v2399
    %v2404 = vsel %vm744, %v2402, 0
    %2406 = vmatpush.bf16.msra.mxu0 0
    %2407 = vmatpush.bf16.msra.mxu0 0
    %2408 = vmatpush.bf16.msra.mxu0 0
    %2409 = vmatpush.bf16.msra.mxu0 0
    %2410 = vmatpush.bf16.msra.mxu0 %v900
    %2411 = vmatpush.bf16.msra.mxu0 %v898
    %2412 = vmatpush.bf16.msra.mxu0 %v896
    %2413 = vmatpush.bf16.msra.mxu0 %v894
    %2414 = vmatmul.bf16.gmra.mxu0 %v2404
    %v2415 = vpop.f32.mrf.mxu0
    %v2416 = vadd.f32 0.0, %v2415
    %v2417 = vpop.f32.mrf.mxu0
    %2418 = vdwg.mxu0
    %2419 = vmatpush.bf16.msra.mxu0 0
    %2420 = vmatpush.bf16.msra.mxu0 0
    %2421 = vmatpush.bf16.msra.mxu0 0
    %2422 = vmatpush.bf16.msra.mxu0 0
    %2423 = vmatpush.bf16.msra.mxu0 %v901
    %2424 = vmatpush.bf16.msra.mxu0 %v899
    %2425 = vmatpush.bf16.msra.mxu0 %v897
    %2426 = vmatpush.bf16.msra.mxu0 %v895
    %2427 = vmatmul.bf16.gmra.mxu0 %v2404
    %v2428 = vpop.f32.mrf.mxu0
    %v2429 = vadd.f32 0.0, %v2428
    %v2430 = vpop.f32.mrf.mxu0
    %2431 = vdwg.mxu0
    %v2433 = vrot.slane %v2401, 3
    %v2435 = vsel %vm744, %v2433, 0
    %2437 = vmatpush.bf16.msra.mxu0 0
    %2438 = vmatpush.bf16.msra.mxu0 0
    %2439 = vmatpush.bf16.msra.mxu0 0
    %2440 = vmatpush.bf16.msra.mxu0 0
    %2441 = vmatpush.bf16.msra.mxu0 %v966
    %2442 = vmatpush.bf16.msra.mxu0 %v964
    %2443 = vmatpush.bf16.msra.mxu0 %v962
    %2444 = vmatpush.bf16.msra.mxu0 %v960
    %2445 = vmatmul.bf16.gmra.mxu0 %v2435
    %v2446 = vpop.f32.mrf.mxu0
    %v2447 = vadd.f32 %v2416, %v2446
    %v2448 = vpop.f32.mrf.mxu0
    %2449 = vdwg.mxu0
    %2450 = vmatpush.bf16.msra.mxu0 0
    %2451 = vmatpush.bf16.msra.mxu0 0
    %2452 = vmatpush.bf16.msra.mxu0 0
    %2453 = vmatpush.bf16.msra.mxu0 0
    %2454 = vmatpush.bf16.msra.mxu0 %v967
    %2455 = vmatpush.bf16.msra.mxu0 %v965
    %2456 = vmatpush.bf16.msra.mxu0 %v963
    %2457 = vmatpush.bf16.msra.mxu0 %v961
    %2458 = vmatmul.bf16.gmra.mxu0 %v2435
    %v2459 = vpop.f32.mrf.mxu0
    %v2460 = vadd.f32 %v2429, %v2459
    %v2461 = vpop.f32.mrf.mxu0
    %2462 = vdwg.mxu0
    %v2463 = vadd.f32 %v2447, %v1003
    %v2464 = vadd.f32 %v2460, %v1004
    %v2465 = vxor.u32 %v2463, 2147483648
    %v2466 = vxor.u32 %v2464, 2147483648
    %v2467 = vmul.f32 %v2465, 1.442695
    %v2468 = vpow.pop %v2467
    %v2469 = vmul.f32 %v2466, 1.442695
    %v2470 = vpow.pop %v2469
    %v2471 = vadd.f32 %v2468, 1.0
    %v2472 = vadd.f32 %v2470, 1.0
    %v2473 = vrcp.pop %v2471
    %v2474 = vmul.f32 %v2471, %v2473
    %v2475 = vsub.f32 1.0, %v2474
    %v2476 = vmul.f32 %v2473, %v2475
    %v2477 = vadd.f32 %v2473, %v2476
    %vm2478 = vweird.f32 %v2471
    %vm2479 = vweird.f32 %v2473
    %vm2480 = vmor %vm2478, %vm2479
    %v2481 = vsel %vm2480, %v2473, %v2477
    %v2482 = vand.u32 2147483647, %v2471
    %vm2483 = vcmp.eq.f32.partialorder %v2482, 8.507059e+37
    %v2484 = vand.u32 %v2471, 2147483648
    %v2485 = vor.u32 1.1754944e-38, %v2484
    %v2486 = vsel %vm2483, %v2485, %v2481
    %v2487 = vmul.f32 1.0, %v2486
    %v2488 = vrcp.pop %v2472
    %v2489 = vmul.f32 %v2472, %v2488
    %v2490 = vsub.f32 1.0, %v2489
    %v2491 = vmul.f32 %v2488, %v2490
    %v2492 = vadd.f32 %v2488, %v2491
    %vm2493 = vweird.f32 %v2472
    %vm2494 = vweird.f32 %v2488
    %vm2495 = vmor %vm2493, %vm2494
    %v2496 = vsel %vm2495, %v2488, %v2492
    %v2497 = vand.u32 2147483647, %v2472
    %vm2498 = vcmp.eq.f32.partialorder %v2497, 8.507059e+37
    %v2499 = vand.u32 %v2472, 2147483648
    %v2500 = vor.u32 1.1754944e-38, %v2499
    %v2501 = vsel %vm2498, %v2500, %v2496
    %v2502 = vmul.f32 1.0, %v2501
    %v2503 = vtanh.pop %v2464
    %v2504 = vmul.f32 %v2487, %v2393
    %2506 = vrot.lane.b32.xlu0 %v2503, 64
    %v2507 = vpop.permute.xlu0 %2506
    %v2509 = vmul.f32 %v2487, %v2507
    %2511 = vrot.lane.b32.xlu0 %v2509, 64
    %v2512 = vpop.permute.xlu0 %2511
    %v2514 = vadd.f32 %v2504, %v2512
    %v2515 = vtanh.pop %v2514
    %2517 = vrot.lane.b32.xlu0 %v2515, 64
    %v2518 = vpop.permute.xlu0 %2517
    %v2520 = vmul.f32 %v2502, %v2518
    %v2521 = vadd.f32 %v2400, %v2520
    %v2522 = vld [vmem:[%s9] sm:$0xff]
    %v2523 = vld [vmem:[%s9 + $0x8] sm:$0xff]
    %v2524 = vld [vmem:[%s9 + $0x10] sm:$0xff]
    %v2525 = vld [vmem:[%s9 + $0x18] sm:$0xff]
    %v2526 = vld [vmem:[%s9 + $0x20] sm:$0xff]
    %v2527 = vld [vmem:[%s9 + $0x28] sm:$0xff]
    %v2528 = vld [vmem:[%s9 + $0x30] sm:$0xff]
    %v2529 = vld [vmem:[%s9 + $0x38] sm:$0xff]
    %v2530 = vld [vmem:[%s10] sm:$0x1]
    %v2532 = vperm.slane %v2530, 0
    %v2535 = vsel %vm744, %v2521, 0
    %2537 = vmatpush.msra.mxu0 0.0
    %2538 = vmatpush.msra.mxu0 0.0
    %2539 = vmatpush.msra.mxu0 0.0
    %2540 = vmatpush.msra.mxu0 0.0
    %2541 = vmatpush.msra.mxu0 0.0
    %2542 = vmatpush.msra.mxu0 0.0
    %2543 = vmatpush.msra.mxu0 0.0
    %2544 = vmatpush.msra.mxu0 0.0
    %2545 = vmatpush.msra.mxu0 %v2529
    %2546 = vmatpush.msra.mxu0 %v2528
    %2547 = vmatpush.msra.mxu0 %v2527
    %2548 = vmatpush.msra.mxu0 %v2526
    %2549 = vmatpush.msra.mxu0 %v2525
    %2550 = vmatpush.msra.mxu0 %v2524
    %2551 = vmatpush.msra.mxu0 %v2523
    %2552 = vmatpush.msra.mxu0 %v2522
    %2553 = vmatmul.f32.gmra.mxu0 %v2535
    %v2554 = vpop.f32.mrf.mxu0
    %v2555 = vadd.f32 %v2532, %v2554
    %2556 = vdwg.mxu0
    %vm2557 = vcmask 74752
    %v2558 = vsel %vm2557, %v2555, -inf
    %2559 = vmax.xlane.f32.xlu0 %v2558
    %v2560 = vpop.xlane.xlu0 %2559
    %v2561 = vsub.f32 %v2555, %v2560
    %v2562 = vmul.f32 %v2561, 1.442695
    %v2563 = vpow.pop %v2562
    %v2564 = vsel %vm2557, %v2563, 0.0
    %2565 = vadd.xlane.f32.xlu0 %v2564
    %v2566 = vpop.xlane.xlu0 %2565
    %v2567 = vrcp.pop %v2566
    %v2568 = vmul.f32 %v2563, %v2567
    %2569 = vst.msk [vmem:[#allocation2] sm:$0x3] %vm2557, %v2568
    // Predicated region
    $region46: #{efficientnet_lstm_forward.1} parent=1 // pred_check
      _
    $region47: #{efficientnet_lstm_forward.1} parent=1 // pred_check_branch
      %2571 = sbr.rel (0) target = $region49
    $region48: #{efficientnet_lstm_forward.1} parent=1 // pred_region
      %2573 = vsyncadd [#allocation3], 0
      %s2575 = sshll.u32 [#allocation2], 4
      %s2576 = int_to_ptr.vmem [resolvable:$true] %s2575
      %s2577 = sshll.u32 %s11, 4
      %s2578 = int_to_ptr.hbm [resolvable:$true] %s2577
      %2580 = dma.vmem_to_hbm [thread:$0]  %s2576, 32, %s2578, [#allocation3]
    $region49: #{efficientnet_lstm_forward.1} parent=1 // pred_fallthru
      _
    // Predicated region
    $region50: #{efficientnet_lstm_forward.1} parent=1 // pred_check
      _
    $region51: #{efficientnet_lstm_forward.1} parent=1 // pred_check_branch
      %2582 = sbr.rel (0) target = $region53
    $region52: #{efficientnet_lstm_forward.1} parent=1 // pred_region
      %2584 = dma.done [#allocation3], 32
    $region53: #{efficientnet_lstm_forward.1} parent=1 // pred_fallthru
      _
    %2585 = vsyncpa [#allocation3], 1

</llo_original>
